<compile_context>
chip_gen: v5e
topology: v5e:2x2
jax: 0.10.0
libtpu: 0.0.40
codegen_flags: <defaults>
</compile_context>

<pallas_src>
import functools

import jax
import jax.numpy as jnp
from jax.experimental import pallas as pl
from jax.experimental.pallas import tpu as pltpu

BN_EPS = 1e-5


# -----------------------------------------------------------------------------
# Pallas kernels
# -----------------------------------------------------------------------------
def _conv_bn_kernel(*refs, K, stride, Th, Rc, Wo, relu, has_res):
    """Direct KxK conv for one (image, Cout tile, output-row tile).

    bf16 inputs/weights, f32 accumulation.  The output-row tile (Th rows) is
    processed in static inner chunks of Rc rows so the f32 accumulator stays
    small (register-resident) instead of being a large VMEM accumulator that
    gets read-modify-written on every tap.  Folded BatchNorm (scale/shift),
    optional residual add and optional ReLU are fused into the epilogue.
    """
    x_ref, w_ref, sc_ref, sh_ref = refs[:4]
    res_ref = refs[4] if has_res else None
    o_ref = refs[-1]

    s = stride
    cin = x_ref.shape[-1]
    tco = o_ref.shape[-1]
    rb = pl.program_id(2) * Th            # first output row of this block

    sc = sc_ref[...]                      # (1, tco) f32
    sh = sh_ref[...]

    for ci in range(Th // Rc):            # static inner chunk loop
        row0 = ci * Rc                    # chunk start within the output block
        acc = jnp.zeros((Rc * Wo, tco), jnp.float32)
        for kh in range(K):
            for kw in range(K):
                ph = (kh % s) * s + (kw % s)   # spatial phase of the input
                r0, c0 = kh // s, kw // s      # static offsets inside the phase
                win = x_ref[0, ph, pl.ds(rb + row0 + r0, Rc), pl.ds(c0, Wo), :]
                acc = acc + jnp.dot(win.reshape(Rc * Wo, cin), w_ref[kh, kw],
                                    preferred_element_type=jnp.float32)
        y = acc * sc + sh
        if has_res:
            res = res_ref[0, row0:row0 + Rc, :, :]
            y = y + res.reshape(Rc * Wo, tco).astype(jnp.float32)
        if relu:
            y = jnp.maximum(y, 0.0)
        o_ref[0, row0:row0 + Rc, :, :] = y.reshape(Rc, Wo, tco).astype(o_ref.dtype)


def _pool_head_kernel(x_ref, w1_ref, b1_ref, w2_ref, b2_ref, o_ref):
    # AvgPool2d(4,4) on a 4x4 map == spatial mean; then flatten + 2-layer MLP.
    # TODO(synk): Dropout(p=0.5) is eval-mode identity; no RNG mask implemented.
    x = x_ref[...].astype(jnp.float32)                 # (N, 16, C)
    pooled = jnp.mean(x, axis=1)                       # (N, C)
    h = jnp.dot(pooled, w1_ref[...], preferred_element_type=jnp.float32) + b1_ref[...]
    h = jnp.maximum(h, 0.0)
    o_ref[...] = jnp.dot(h, w2_ref[...], preferred_element_type=jnp.float32) + b2_ref[...]


# -----------------------------------------------------------------------------
# Wrappers (JAX glue: padding, phase deinterleave, parameter plumbing)
# -----------------------------------------------------------------------------
def _space_to_phase(xp, s):
    """(N, Hp, Wp, C) -> (N, s*s, Hp//s, Wp//s, C); phase a*s+b holds xp[:, a::s, b::s, :]."""
    n, hp, wp, c = xp.shape
    if s == 1:
        return xp.reshape(n, 1, hp, wp, c)
    x = xp.reshape(n, hp // s, s, wp // s, s, c)
    x = jnp.transpose(x, (0, 2, 4, 1, 3, 5))
    return x.reshape(n, s * s, hp // s, wp // s, c)


def conv_bn(x, w, scale, shift, *, stride, relu, residual=None):
    """y = ReLU?(conv(x, w, stride, pad=(K-1)//2) * scale + shift (+ residual)). bf16 out."""
    n, h, wdt, cin = x.shape
    k = w.shape[0]
    cout = w.shape[-1]
    pad = (k - 1) // 2

    if k == 1 and stride > 1:
        # 1x1 strided conv: subsample in the wrapper; avoids DMAing unused phases.
        x = x[:, ::stride, ::stride, :]
        n, h, wdt, cin = x.shape
        stride = 1

    ho, wo = h // stride, wdt // stride

    # pad Cin up to a multiple of 8 (layer1 patch-folded conv has Cin=9)
    cin_p = max(8, ((cin + 7) // 8) * 8)
    if cin_p != cin:
        x = jnp.pad(x, ((0, 0), (0, 0), (0, 0), (0, cin_p - cin)))
        w = jnp.pad(w, ((0, 0), (0, 0), (0, cin_p - cin), (0, 0)))
        cin = cin_p

    xp = jnp.pad(x, ((0, 0), (pad, pad), (pad, pad), (0, 0))) if pad else x
    xph = _space_to_phase(xp, stride)                 # (N, s*s, Hq, Wq, Cin) bf16
    _, ss, hq, wq, _ = xph.shape

    tco = min(cout, 256)                              # Cout tile (matches MXU N=256)
    assert cout % tco == 0, (cout, tco)
    # output-row tile for the grid (bounds output/residual block DMA size)
    th = min(ho, max(1, 65536 // (wo * tco)))
    assert ho % th == 0, (ho, th)
    # inner chunk rows: keep the f32 accumulator around <= ~32 vregs
    target_m = 256 if tco <= 128 else 128
    rc = min(th, max(1, target_m // wo))
    assert th % rc == 0, (th, rc)

    grid = (cout // tco, n, ho // th)                 # weights reused across batch/rows

    in_specs = [
        pl.BlockSpec((1, ss, hq, wq, cin), lambda j, i, r: (i, 0, 0, 0, 0)),
        pl.BlockSpec((k, k, cin, tco), lambda j, i, r: (0, 0, 0, j)),
        pl.BlockSpec((1, tco), lambda j, i, r: (0, j)),
        pl.BlockSpec((1, tco), lambda j, i, r: (0, j)),
    ]
    args = [xph, w.astype(jnp.bfloat16), scale.reshape(1, cout), shift.reshape(1, cout)]
    if residual is not None:
        in_specs.append(pl.BlockSpec((1, th, wo, tco), lambda j, i, r: (i, r, 0, j)))
        args.append(residual)

    kernel = functools.partial(_conv_bn_kernel, K=k, stride=stride, Th=th, Rc=rc,
                               Wo=wo, relu=relu, has_res=residual is not None)
    return pl.pallas_call(
        kernel,
        out_shape=jax.ShapeDtypeStruct((n, ho, wo, cout), jnp.bfloat16),
        grid=grid,
        in_specs=in_specs,
        out_specs=pl.BlockSpec((1, th, wo, tco), lambda j, i, r: (i, r, 0, j)),
        compiler_params=pltpu.CompilerParams(
            dimension_semantics=("parallel", "parallel", "arbitrary"),
            vmem_limit_bytes=48 * 1024 * 1024),       # <= v7x physical 64 MiB
    )(*args)


def conv1_3x3_as_1x1(x, w, scale, shift):
    """layer1: fold all 9 taps of the Cin=1 3x3 conv into the contraction dim (Cin=9)."""
    n, h, wd, _ = x.shape
    xp = jnp.pad(x, ((0, 0), (1, 1), (1, 1), (0, 0)))
    patches = jnp.concatenate(
        [xp[:, kh:kh + h, kw:kw + wd, :] for kh in range(3) for kw in range(3)],
        axis=-1)                                        # (N, H, W, 9) bf16
    w9 = w.reshape(1, 1, 9, w.shape[-1])                # taps ordered kh*3+kw, matches patches
    return conv_bn(patches, w9, scale, shift, stride=1, relu=True)


def pool_head(x, w1, b1, w2, b2):
    """Fused AvgPool2d(4) + flatten + Dropout(eval) + Linear + ReLU + Linear."""
    n, h, w_, c = x.shape
    x = x.reshape(n, h * w_, c)
    return pl.pallas_call(
        _pool_head_kernel,
        out_shape=jax.ShapeDtypeStruct((n, w2.shape[1]), jnp.float32),
    )(x, w1, b1.reshape(1, -1), w2, b2.reshape(1, -1))


# -----------------------------------------------------------------------------
# Deterministic parameter construction (synthetic, no checkpoint loading)
# -----------------------------------------------------------------------------
class _KeyGen:
    def __init__(self, key):
        self._key = key
        self._n = 0

    def __call__(self):
        self._n += 1
        return jax.random.fold_in(self._key, self._n)


def _conv_w(kg, k, cin, cout):
    std = (2.0 / (k * k * cin)) ** 0.5
    w = std * jax.random.normal(kg(), (k, k, cin, cout), jnp.float32)
    return w.astype(jnp.bfloat16)                       # weights stored in bf16


def _bn_params(kg, c):
    gamma = 1.0 + 0.1 * jax.random.normal(kg(), (c,), jnp.float32)
    beta = 0.1 * jax.random.normal(kg(), (c,), jnp.float32)
    mean = 0.1 * jax.random.normal(kg(), (c,), jnp.float32)
    var = 0.9 + 0.2 * jax.random.uniform(kg(), (c,), jnp.float32)
    return gamma, beta, mean, var


def _fold_bn(gamma, beta, mean, var, bias=None):
    scale = gamma / jnp.sqrt(var + BN_EPS)
    shift = beta - mean * scale
    if bias is not None:
        shift = shift + bias * scale
    return scale, shift


def make_block_params(kg, cin, cout, stride):
    p = {"stride": stride}
    p["w1"] = _conv_w(kg, 3, cin, cout)
    p["s1"], p["t1"] = _fold_bn(*_bn_params(kg, cout))
    p["w2"] = _conv_w(kg, 3, cout, cout)
    p["s2"], p["t2"] = _fold_bn(*_bn_params(kg, cout))
    if stride != 1 or cin != cout:
        p["ws"] = _conv_w(kg, 1, cin, cout)
        p["ss"], p["ts"] = _fold_bn(*_bn_params(kg, cout))
    return p


def make_resnet_params(key):
    kg = _KeyGen(key)
    params = {}
    # layer1: Conv2d(1, 64, 3, padding=1, bias=True) + BatchNorm2d(64) + ReLU
    params["l1_w"] = _conv_w(kg, 3, 1, 64)
    l1_bias = 0.1 * jax.random.normal(kg(), (64,), jnp.float32)
    params["l1_s"], params["l1_t"] = _fold_bn(*_bn_params(kg, 64), bias=l1_bias)
    cfg = [(64, 64, 1), (64, 64, 1),        # layer2
           (64, 128, 2), (128, 128, 1),     # layer4
           (128, 256, 2), (256, 256, 1),    # layer5
           (256, 512, 2), (512, 512, 1),    # layer6
           (512, 1024, 2), (1024, 1024, 1)] # layer7
    params["blocks"] = [make_block_params(kg, ci, co, s) for ci, co, s in cfg]
    params["fc1_w"] = (1.0 / 1024 ** 0.5) * jax.random.normal(kg(), (1024, 512), jnp.float32)
    params["fc1_b"] = 0.01 * jax.random.normal(kg(), (512,), jnp.float32)
    params["fc2_w"] = (1.0 / 512 ** 0.5) * jax.random.normal(kg(), (512, 37 * 4 + 20), jnp.float32)
    params["fc2_b"] = 0.01 * jax.random.normal(kg(), (37 * 4 + 20,), jnp.float32)
    return params


# -----------------------------------------------------------------------------
# Forward pass
# -----------------------------------------------------------------------------
def basic_block(x, p):
    s = p["stride"]
    out = conv_bn(x, p["w1"], p["s1"], p["t1"], stride=s, relu=True)
    if "ws" in p:
        shortcut = conv_bn(x, p["ws"], p["ss"], p["ts"], stride=s, relu=False)
    else:
        shortcut = x
    # conv2 + BN, residual add and final ReLU fused inside the kernel
    return conv_bn(out, p["w2"], p["s2"], p["t2"], stride=1, relu=True,
                   residual=shortcut)


def resnet_forward(x_nchw, params):
    # layout: input follows PyTorch NCHW; transpose once to NHWC (bf16) for kernels.
    x = jnp.transpose(x_nchw, (0, 2, 3, 1)).astype(jnp.bfloat16)
    x = conv1_3x3_as_1x1(x, params["l1_w"], params["l1_s"], params["l1_t"])   # layer1
    for p in params["blocks"]:                                                # layer2,4,5,6,7
        x = basic_block(x, p)
    out = pool_head(x, params["fc1_w"], params["fc1_b"],
                    params["fc2_w"], params["fc2_b"])                         # (N, 168) f32
    cls = out[:, 0:20].reshape(-1, 10, 2)
    bb1 = out[:, 20:].reshape(-1, 4, 37)
    return cls, bb1


if __name__ == "__main__":
    key = jax.random.PRNGKey(0)
    params = make_resnet_params(jax.random.fold_in(key, 1))
    # 64x64 single-channel input is required by the architecture
    # (Linear(1024, 512) after 16x downsampling + AvgPool(4) => 1x1x1024).
    x = jax.random.normal(jax.random.fold_in(key, 2), (2, 1, 64, 64), jnp.float32)

    cls, bb1 = resnet_forward(x, params)
    jax.block_until_ready((cls, bb1))
    assert cls.shape == (2, 10, 2) and cls.dtype == jnp.float32
    assert bb1.shape == (2, 4, 37) and bb1.dtype == jnp.float32
    print("KERNEL_OK")
</pallas_src>

<mosaic_0001>
module attributes {stable_mosaic.version = 11 : i64} {
  func.func @_conv_bn_kernel(%arg0: i32, %arg1: i32, %arg2: i32, %arg3: memref<1x1x64x64x16xbf16, #tpu.memory_space<vmem>>, %arg4: memref<1x1x16x64xbf16, #tpu.memory_space<vmem>>, %arg5: memref<1x64xf32, #tpu.memory_space<vmem>>, %arg6: memref<1x64xf32, #tpu.memory_space<vmem>>, %arg7: memref<1x16x64x64xbf16, #tpu.memory_space<vmem>>) attributes {dimension_semantics = [#tpu.dimension_semantics<parallel>, #tpu.dimension_semantics<parallel>, #tpu.dimension_semantics<arbitrary>], iteration_bounds = array<i64: 1, 2, 4>, scalar_prefetch = 0 : i64, scratch_operands = 0 : i64, tpu.core_type = #tpu.core_type<tc>, window_params = [{transform_indices = @transform_0, window_bounds = array<i64: 1, 1, 64, 64, 16>}, {transform_indices = @transform_1, window_bounds = array<i64: 1, 1, 16, 64>}, {transform_indices = @transform_2, window_bounds = array<i64: 1, 64>}, {transform_indices = @transform_3, window_bounds = array<i64: 1, 64>}, {transform_indices = @transform_4, window_bounds = array<i64: 1, 16, 64, 64>}]} {
    %c16_i32 = arith.constant 16 : i32
    %0 = arith.muli %arg2, %c16_i32 : i32
    %c0 = arith.constant 0 : index
    %c0_0 = arith.constant 0 : index
    %1 = vector.load %arg5[%c0, %c0_0] : memref<1x64xf32, #tpu.memory_space<vmem>>, vector<1x64xf32>
    %c0_1 = arith.constant 0 : index
    %c0_2 = arith.constant 0 : index
    %2 = vector.load %arg6[%c0_1, %c0_2] : memref<1x64xf32, #tpu.memory_space<vmem>>, vector<1x64xf32>
    %cst = arith.constant 0.000000e+00 : f32
    %3 = vector.broadcast %cst : f32 to vector<256x64xf32>
    %c0_i32 = arith.constant 0 : i32
    %4 = arith.addi %0, %c0_i32 : i32
    %c0_i32_3 = arith.constant 0 : i32
    %5 = arith.addi %4, %c0_i32_3 : i32
    %c0_4 = arith.constant 0 : index
    %c0_5 = arith.constant 0 : index
    %6 = arith.index_cast %5 : i32 to index
    %c0_6 = arith.constant 0 : index
    %c0_7 = arith.constant 0 : index
    %7 = vector.load %arg3[%c0_4, %c0_5, %6, %c0_6, %c0_7] : memref<1x1x64x64x16xbf16, #tpu.memory_space<vmem>>, vector<1x1x4x64x16xbf16>
    %8 = vector.shape_cast %7 : vector<1x1x4x64x16xbf16> to vector<4x64x16xbf16>
    %9 = vector.shape_cast %8 : vector<4x64x16xbf16> to vector<256x16xbf16>
    %c0_8 = arith.constant 0 : index
    %c0_9 = arith.constant 0 : index
    %c0_10 = arith.constant 0 : index
    %c0_11 = arith.constant 0 : index
    %10 = vector.load %arg4[%c0_8, %c0_9, %c0_10, %c0_11] : memref<1x1x16x64xbf16, #tpu.memory_space<vmem>>, vector<1x1x16x64xbf16>
    %11 = vector.shape_cast %10 : vector<1x1x16x64xbf16> to vector<16x64xbf16>
    %cst_12 = arith.constant dense<0.000000e+00> : vector<256x64xf32>
    %12 = tpu.matmul %9, %11, %cst_12 {dimension_numbers = #tpu.dot_dimension_numbers<[1], [0], [0], [1], [0, 0, 1, 1], [], []>} : vector<256x16xbf16>, vector<16x64xbf16>, vector<256x64xf32> -> vector<256x64xf32>
    %13 = arith.addf %3, %12 : vector<256x64xf32>
    %14 = vector.broadcast %1 : vector<1x64xf32> to vector<256x64xf32>
    %15 = arith.mulf %13, %14 : vector<256x64xf32>
    %16 = vector.broadcast %2 : vector<1x64xf32> to vector<256x64xf32>
    %17 = arith.addf %15, %16 : vector<256x64xf32>
    %cst_13 = arith.constant 0.000000e+00 : f32
    %18 = vector.broadcast %cst_13 : f32 to vector<256x64xf32>
    %19 = arith.maximumf %17, %18 : vector<256x64xf32>
    %20 = vector.shape_cast %19 : vector<256x64xf32> to vector<4x64x64xf32>
    %21 = arith.truncf %20 : vector<4x64x64xf32> to vector<4x64x64xbf16>
    %c0_14 = arith.constant 0 : index
    %c0_15 = arith.constant 0 : index
    %c0_16 = arith.constant 0 : index
    %c0_17 = arith.constant 0 : index
    %22 = vector.load %arg7[%c0_14, %c0_15, %c0_16, %c0_17] : memref<1x16x64x64xbf16, #tpu.memory_space<vmem>>, vector<1x4x64x64xbf16>
    %23 = vector.shape_cast %22 : vector<1x4x64x64xbf16> to vector<4x64x64xbf16>
    %24 = vector.shape_cast %21 : vector<4x64x64xbf16> to vector<1x4x64x64xbf16>
    tpu.vector_store %arg7[%c0_14, %c0_15, %c0_16, %c0_17], %24 {strides = array<i32>} : memref<1x16x64x64xbf16, #tpu.memory_space<vmem>>, vector<1x4x64x64xbf16>,
    %cst_18 = arith.constant 0.000000e+00 : f32
    %25 = vector.broadcast %cst_18 : f32 to vector<256x64xf32>
    %c4_i32 = arith.constant 4 : i32
    %26 = arith.addi %0, %c4_i32 : i32
    %c0_i32_19 = arith.constant 0 : i32
    %27 = arith.addi %26, %c0_i32_19 : i32
    %c0_20 = arith.constant 0 : index
    %c0_21 = arith.constant 0 : index
    %28 = arith.index_cast %27 : i32 to index
    %c0_22 = arith.constant 0 : index
    %c0_23 = arith.constant 0 : index
    %29 = vector.load %arg3[%c0_20, %c0_21, %28, %c0_22, %c0_23] : memref<1x1x64x64x16xbf16, #tpu.memory_space<vmem>>, vector<1x1x4x64x16xbf16>
    %30 = vector.shape_cast %29 : vector<1x1x4x64x16xbf16> to vector<4x64x16xbf16>
    %31 = vector.shape_cast %30 : vector<4x64x16xbf16> to vector<256x16xbf16>
    %c0_24 = arith.constant 0 : index
    %c0_25 = arith.constant 0 : index
    %c0_26 = arith.constant 0 : index
    %c0_27 = arith.constant 0 : index
    %32 = vector.load %arg4[%c0_24, %c0_25, %c0_26, %c0_27] : memref<1x1x16x64xbf16, #tpu.memory_space<vmem>>, vector<1x1x16x64xbf16>
    %33 = vector.shape_cast %32 : vector<1x1x16x64xbf16> to vector<16x64xbf16>
    %cst_28 = arith.constant dense<0.000000e+00> : vector<256x64xf32>
    %34 = tpu.matmul %31, %33, %cst_28 {dimension_numbers = #tpu.dot_dimension_numbers<[1], [0], [0], [1], [0, 0, 1, 1], [], []>} : vector<256x16xbf16>, vector<16x64xbf16>, vector<256x64xf32> -> vector<256x64xf32>
    %35 = arith.addf %25, %34 : vector<256x64xf32>
    %36 = vector.broadcast %1 : vector<1x64xf32> to vector<256x64xf32>
    %37 = arith.mulf %35, %36 : vector<256x64xf32>
    %38 = vector.broadcast %2 : vector<1x64xf32> to vector<256x64xf32>
    %39 = arith.addf %37, %38 : vector<256x64xf32>
    %cst_29 = arith.constant 0.000000e+00 : f32
    %40 = vector.broadcast %cst_29 : f32 to vector<256x64xf32>
    %41 = arith.maximumf %39, %40 : vector<256x64xf32>
    %42 = vector.shape_cast %41 : vector<256x64xf32> to vector<4x64x64xf32>
    %43 = arith.truncf %42 : vector<4x64x64xf32> to vector<4x64x64xbf16>
    %c0_30 = arith.constant 0 : index
    %c4 = arith.constant 4 : index
    %c0_31 = arith.constant 0 : index
    %c0_32 = arith.constant 0 : index
    %44 = vector.load %arg7[%c0_30, %c4, %c0_31, %c0_32] : memref<1x16x64x64xbf16, #tpu.memory_space<vmem>>, vector<1x4x64x64xbf16>
    %45 = vector.shape_cast %44 : vector<1x4x64x64xbf16> to vector<4x64x64xbf16>
    %46 = vector.shape_cast %43 : vector<4x64x64xbf16> to vector<1x4x64x64xbf16>
    tpu.vector_store %arg7[%c0_30, %c4, %c0_31, %c0_32], %46 {strides = array<i32>} : memref<1x16x64x64xbf16, #tpu.memory_space<vmem>>, vector<1x4x64x64xbf16>,
    %cst_33 = arith.constant 0.000000e+00 : f32
    %47 = vector.broadcast %cst_33 : f32 to vector<256x64xf32>
    %c8_i32 = arith.constant 8 : i32
    %48 = arith.addi %0, %c8_i32 : i32
    %c0_i32_34 = arith.constant 0 : i32
    %49 = arith.addi %48, %c0_i32_34 : i32
    %c0_35 = arith.constant 0 : index
    %c0_36 = arith.constant 0 : index
    %50 = arith.index_cast %49 : i32 to index
    %c0_37 = arith.constant 0 : index
    %c0_38 = arith.constant 0 : index
    %51 = vector.load %arg3[%c0_35, %c0_36, %50, %c0_37, %c0_38] : memref<1x1x64x64x16xbf16, #tpu.memory_space<vmem>>, vector<1x1x4x64x16xbf16>
    %52 = vector.shape_cast %51 : vector<1x1x4x64x16xbf16> to vector<4x64x16xbf16>
    %53 = vector.shape_cast %52 : vector<4x64x16xbf16> to vector<256x16xbf16>
    %c0_39 = arith.constant 0 : index
    %c0_40 = arith.constant 0 : index
    %c0_41 = arith.constant 0 : index
    %c0_42 = arith.constant 0 : index
    %54 = vector.load %arg4[%c0_39, %c0_40, %c0_41, %c0_42] : memref<1x1x16x64xbf16, #tpu.memory_space<vmem>>, vector<1x1x16x64xbf16>
    %55 = vector.shape_cast %54 : vector<1x1x16x64xbf16> to vector<16x64xbf16>
    %cst_43 = arith.constant dense<0.000000e+00> : vector<256x64xf32>
    %56 = tpu.matmul %53, %55, %cst_43 {dimension_numbers = #tpu.dot_dimension_numbers<[1], [0], [0], [1], [0, 0, 1, 1], [], []>} : vector<256x16xbf16>, vector<16x64xbf16>, vector<256x64xf32> -> vector<256x64xf32>
    %57 = arith.addf %47, %56 : vector<256x64xf32>
    %58 = vector.broadcast %1 : vector<1x64xf32> to vector<256x64xf32>
    %59 = arith.mulf %57, %58 : vector<256x64xf32>
    %60 = vector.broadcast %2 : vector<1x64xf32> to vector<256x64xf32>
    %61 = arith.addf %59, %60 : vector<256x64xf32>
    %cst_44 = arith.constant 0.000000e+00 : f32
    %62 = vector.broadcast %cst_44 : f32 to vector<256x64xf32>
    %63 = arith.maximumf %61, %62 : vector<256x64xf32>
    %64 = vector.shape_cast %63 : vector<256x64xf32> to vector<4x64x64xf32>
    %65 = arith.truncf %64 : vector<4x64x64xf32> to vector<4x64x64xbf16>
    %c0_45 = arith.constant 0 : index
    %c8 = arith.constant 8 : index
    %c0_46 = arith.constant 0 : index
    %c0_47 = arith.constant 0 : index
    %66 = vector.load %arg7[%c0_45, %c8, %c0_46, %c0_47] : memref<1x16x64x64xbf16, #tpu.memory_space<vmem>>, vector<1x4x64x64xbf16>
    %67 = vector.shape_cast %66 : vector<1x4x64x64xbf16> to vector<4x64x64xbf16>
    %68 = vector.shape_cast %65 : vector<4x64x64xbf16> to vector<1x4x64x64xbf16>
    tpu.vector_store %arg7[%c0_45, %c8, %c0_46, %c0_47], %68 {strides = array<i32>} : memref<1x16x64x64xbf16, #tpu.memory_space<vmem>>, vector<1x4x64x64xbf16>,
    %cst_48 = arith.constant 0.000000e+00 : f32
    %69 = vector.broadcast %cst_48 : f32 to vector<256x64xf32>
    %c12_i32 = arith.constant 12 : i32
    %70 = arith.addi %0, %c12_i32 : i32
    %c0_i32_49 = arith.constant 0 : i32
    %71 = arith.addi %70, %c0_i32_49 : i32
    %c0_50 = arith.constant 0 : index
    %c0_51 = arith.constant 0 : index
    %72 = arith.index_cast %71 : i32 to index
    %c0_52 = arith.constant 0 : index
    %c0_53 = arith.constant 0 : index
    %73 = vector.load %arg3[%c0_50, %c0_51, %72, %c0_52, %c0_53] : memref<1x1x64x64x16xbf16, #tpu.memory_space<vmem>>, vector<1x1x4x64x16xbf16>
    %74 = vector.shape_cast %73 : vector<1x1x4x64x16xbf16> to vector<4x64x16xbf16>
    %75 = vector.shape_cast %74 : vector<4x64x16xbf16> to vector<256x16xbf16>
    %c0_54 = arith.constant 0 : index
    %c0_55 = arith.constant 0 : index
    %c0_56 = arith.constant 0 : index
    %c0_57 = arith.constant 0 : index
    %76 = vector.load %arg4[%c0_54, %c0_55, %c0_56, %c0_57] : memref<1x1x16x64xbf16, #tpu.memory_space<vmem>>, vector<1x1x16x64xbf16>
    %77 = vector.shape_cast %76 : vector<1x1x16x64xbf16> to vector<16x64xbf16>
    %cst_58 = arith.constant dense<0.000000e+00> : vector<256x64xf32>
    %78 = tpu.matmul %75, %77, %cst_58 {dimension_numbers = #tpu.dot_dimension_numbers<[1], [0], [0], [1], [0, 0, 1, 1], [], []>} : vector<256x16xbf16>, vector<16x64xbf16>, vector<256x64xf32> -> vector<256x64xf32>
    %79 = arith.addf %69, %78 : vector<256x64xf32>
    %80 = vector.broadcast %1 : vector<1x64xf32> to vector<256x64xf32>
    %81 = arith.mulf %79, %80 : vector<256x64xf32>
    %82 = vector.broadcast %2 : vector<1x64xf32> to vector<256x64xf32>
    %83 = arith.addf %81, %82 : vector<256x64xf32>
    %cst_59 = arith.constant 0.000000e+00 : f32
    %84 = vector.broadcast %cst_59 : f32 to vector<256x64xf32>
    %85 = arith.maximumf %83, %84 : vector<256x64xf32>
    %86 = vector.shape_cast %85 : vector<256x64xf32> to vector<4x64x64xf32>
    %87 = arith.truncf %86 : vector<4x64x64xf32> to vector<4x64x64xbf16>
    %c0_60 = arith.constant 0 : index
    %c12 = arith.constant 12 : index
    %c0_61 = arith.constant 0 : index
    %c0_62 = arith.constant 0 : index
    %88 = vector.load %arg7[%c0_60, %c12, %c0_61, %c0_62] : memref<1x16x64x64xbf16, #tpu.memory_space<vmem>>, vector<1x4x64x64xbf16>
    %89 = vector.shape_cast %88 : vector<1x4x64x64xbf16> to vector<4x64x64xbf16>
    %90 = vector.shape_cast %87 : vector<4x64x64xbf16> to vector<1x4x64x64xbf16>
    tpu.vector_store %arg7[%c0_60, %c12, %c0_61, %c0_62], %90 {strides = array<i32>} : memref<1x16x64x64xbf16, #tpu.memory_space<vmem>>, vector<1x4x64x64xbf16>,
    return
  }
  func.func @transform_0(%arg0: i32, %arg1: i32, %arg2: i32) -> (i32, i32, i32, i32, i32) {
    %c0_i32 = arith.constant 0 : i32
    %c0_i32_0 = arith.constant 0 : i32
    %c0_i32_1 = arith.constant 0 : i32
    %c0_i32_2 = arith.constant 0 : i32
    %c0_i32_3 = arith.constant 0 : i32
    return %arg1, %c0_i32, %c0_i32_0, %c0_i32_1, %c0_i32_2 : i32, i32, i32, i32, i32
  }
  func.func @transform_1(%arg0: i32, %arg1: i32, %arg2: i32) -> (i32, i32, i32, i32) {
    %c0_i32 = arith.constant 0 : i32
    %c0_i32_0 = arith.constant 0 : i32
    %c0_i32_1 = arith.constant 0 : i32
    %c0_i32_2 = arith.constant 0 : i32
    return %c0_i32, %c0_i32_0, %c0_i32_1, %arg0 : i32, i32, i32, i32
  }
  func.func @transform_2(%arg0: i32, %arg1: i32, %arg2: i32) -> (i32, i32) {
    %c0_i32 = arith.constant 0 : i32
    %c0_i32_0 = arith.constant 0 : i32
    return %c0_i32, %arg0 : i32, i32
  }
  func.func @transform_3(%arg0: i32, %arg1: i32, %arg2: i32) -> (i32, i32) {
    %c0_i32 = arith.constant 0 : i32
    %c0_i32_0 = arith.constant 0 : i32
    return %c0_i32, %arg0 : i32, i32
  }
  func.func @transform_4(%arg0: i32, %arg1: i32, %arg2: i32) -> (i32, i32, i32, i32) {
    %c0_i32 = arith.constant 0 : i32
    %c0_i32_0 = arith.constant 0 : i32
    return %arg1, %arg2, %c0_i32, %arg0 : i32, i32, i32, i32
  }
}

</mosaic_0001>

<llo_original>
// kernel: tpu_custom_call.1
$region0: #{tpu_custom_call.1}
  #allocation0 [shape = 'u32[]', space=smem, size = 0x4, offset = 0x4, fixed_abs, tag = 'smem constant byte address 0x4 - core index']
  #allocation1 [shape = 'u32[72,128]{1,0:T(1,128)}', space=vmem, size = 0x9000, scoped, tag = 'internal scratch']
  %s0 = inlined_call_operand.vmem [shape: bf16[2,1,64,64,16], index: 0, kind: input, shape index: {}]
  %s1 = inlined_call_operand.vmem [shape: bf16[1,1,16,64], index: 1, kind: input, shape index: {}]
  %s2 = inlined_call_operand.vmem [shape: f32[1,64], index: 2, kind: input, shape index: {}]
  %s3 = inlined_call_operand.vmem [shape: f32[1,64], index: 3, kind: input, shape index: {}]
  %s4 = inlined_call_operand.hbm [shape: bf16[2,64,64,64], index: 4, kind: output, shape index: {}]
  %s5 = sld [smem:[#allocation0]]
  $region49: #{tpu_custom_call.1} parent=0
    _
  %s7 = ssub.s32 1, %s5
  %s8 = scalar_select 0, %s7, %s5
  $region1: #{tpu_custom_call.1} parent=0
    #allocation2 [shape = 'u8[524288]{0}', space=vmem, size = 0x80000, scoped, tag = 'output window, operand 0']
    #allocation3 [shape = 's32[2]{0}', space=sflag, size = 0x8, scoped, tag = 'scoped memory for tpu_custom_call.1']
    %9 = vsyncpa [#allocation3], 0
    %s10 = scalar_lea.sflag [#allocation3], 1
    %11 = vsyncpa %s10, 0
    loop: start=0, step=1, limit=10
    $region2: #{tpu_custom_call.1} parent=1 // loop_pre_header
      _
    $region3: #{tpu_custom_call.1} parent=1 // loop_header
      %s13 = sphi 0, %s17
      %p14 = scmp.ge.s32.totalorder %s13, 10
      %s20 = sphi 0, %s39
      %s21 = sphi 0, %s35
      %s22 = sphi 0, %s31
      %s23 = sphi 0, %s20
      %s24 = sphi 0, %s21
      %s25 = sphi 0, %s22
      %s26 = sphi 0, %s23
      %s27 = sphi 0, %s24
      %s28 = sphi 0, %s25
      %s42 = sphi 0, %s44
      %s45 = sphi 0, %s42
      %s46 = sphi 0, %s45
      %s62 = sphi 0, %s46
      %s68 = sphi 0, %s70
      %s71 = sphi 0, %s68
      %s72 = sphi 0, %s71
      %s88 = sphi 0, %s72
      %s94 = sphi 0, %s96
      %s97 = sphi 0, %s94
      %s98 = sphi 0, %s97
      %s114 = sphi 0, %s98
      %s120 = sphi 0, %s122
      %s123 = sphi 0, %s120
      %s124 = sphi 0, %s123
      %s140 = sphi 0, %s124
      %s150 = sphi 0, %s152
      %s153 = sphi 0, %s150
      %s154 = sphi 0, %s153
      %s170 = sphi 0, %s154
    $region4: #{tpu_custom_call.1} parent=1 // loop_header_branch
      %16 = sbr.rel (%p14) target = $region8
    $region5: #{tpu_custom_call.1} parent=1 // loop_body
      %s18 = ssub.s32 %s13, 1
      %s19 = ssub.s32 %s13, 2
      %s29 = sadd.s32 1, %s22
      %p30 = scmp.ge.s32.totalorder %s29, 4
      %s31 = scalar_select %p30, 0, %s29
      %s32 = sadd.s32 1, %s21
      %s33 = scalar_select %p30, %s32, %s21
      %p34 = scmp.ge.s32.totalorder %s33, 2
      %s35 = scalar_select %p34, 0, %s33
      %s36 = sadd.s32 1, %s20
      %s37 = scalar_select %p34, %s36, %s20
      %p38 = scmp.ge.s32.totalorder %s37, 1
      %s39 = scalar_select %p38, 0, %s37
      %s40 = ssub.s32 %s21, %s35
      %p41 = scmp.eq.s32.totalorder %s40, 0
      %s43 = sadd.s32 %s42, 1
      %s44 = scalar_select %p41, %s42, %s43
      %p47 = pneg %p41
      %p48 = scmp.eq.s32.totalorder %s13, 7
      %p49 = por %p47, %p48
      %p50 = scmp.ne.s32.totalorder %s42, %s45
      %p51 = scmp.eq.s32.totalorder %s13, 0
      %p52 = por %p50, %p51
      %p53 = scmp.ne.s32.totalorder %s42, %s45
      %p54 = scmp.eq.s32.totalorder %s18, 7
      %p55 = por %p53, %p54
      %p56 = scmp.ne.s32.totalorder %s45, %s46
      %p57 = scmp.eq.s32.totalorder %s18, 0
      %p58 = por %p56, %p57
      %p59 = scmp.ne.s32.totalorder %s45, %s46
      %p60 = scmp.eq.s32.totalorder %s19, 7
      %p61 = por %p59, %p60
      %p63 = scmp.ne.s32.totalorder %s46, %s62
      %p64 = scmp.eq.s32.totalorder %s19, 0
      %p65 = por %p63, %p64
      %s66 = ssub.s32 %s20, %s39
      %p67 = scmp.eq.s32.totalorder %s66, 0
      %s69 = sadd.s32 %s68, 1
      %s70 = scalar_select %p67, %s68, %s69
      %p73 = pneg %p67
      %p74 = scmp.eq.s32.totalorder %s13, 7
      %p75 = por %p73, %p74
      %p76 = scmp.ne.s32.totalorder %s68, %s71
      %p77 = scmp.eq.s32.totalorder %s13, 0
      %p78 = por %p76, %p77
      %p79 = scmp.ne.s32.totalorder %s68, %s71
      %p80 = scmp.eq.s32.totalorder %s18, 7
      %p81 = por %p79, %p80
      %p82 = scmp.ne.s32.totalorder %s71, %s72
      %p83 = scmp.eq.s32.totalorder %s18, 0
      %p84 = por %p82, %p83
      %p85 = scmp.ne.s32.totalorder %s71, %s72
      %p86 = scmp.eq.s32.totalorder %s19, 7
      %p87 = por %p85, %p86
      %p89 = scmp.ne.s32.totalorder %s72, %s88
      %p90 = scmp.eq.s32.totalorder %s19, 0
      %p91 = por %p89, %p90
      %s92 = ssub.s32 %s20, %s39
      %p93 = scmp.eq.s32.totalorder %s92, 0
      %s95 = sadd.s32 %s94, 1
      %s96 = scalar_select %p93, %s94, %s95
      %p99 = pneg %p93
      %p100 = scmp.eq.s32.totalorder %s13, 7
      %p101 = por %p99, %p100
      %p102 = scmp.ne.s32.totalorder %s94, %s97
      %p103 = scmp.eq.s32.totalorder %s13, 0
      %p104 = por %p102, %p103
      %p105 = scmp.ne.s32.totalorder %s94, %s97
      %p106 = scmp.eq.s32.totalorder %s18, 7
      %p107 = por %p105, %p106
      %p108 = scmp.ne.s32.totalorder %s97, %s98
      %p109 = scmp.eq.s32.totalorder %s18, 0
      %p110 = por %p108, %p109
      %p111 = scmp.ne.s32.totalorder %s97, %s98
      %p112 = scmp.eq.s32.totalorder %s19, 7
      %p113 = por %p111, %p112
      %p115 = scmp.ne.s32.totalorder %s98, %s114
      %p116 = scmp.eq.s32.totalorder %s19, 0
      %p117 = por %p115, %p116
      %s118 = ssub.s32 %s20, %s39
      %p119 = scmp.eq.s32.totalorder %s118, 0
      %s121 = sadd.s32 %s120, 1
      %s122 = scalar_select %p119, %s120, %s121
      %p125 = pneg %p119
      %p126 = scmp.eq.s32.totalorder %s13, 7
      %p127 = por %p125, %p126
      %p128 = scmp.ne.s32.totalorder %s120, %s123
      %p129 = scmp.eq.s32.totalorder %s13, 0
      %p130 = por %p128, %p129
      %p131 = scmp.ne.s32.totalorder %s120, %s123
      %p132 = scmp.eq.s32.totalorder %s18, 7
      %p133 = por %p131, %p132
      %p134 = scmp.ne.s32.totalorder %s123, %s124
      %p135 = scmp.eq.s32.totalorder %s18, 0
      %p136 = por %p134, %p135
      %p137 = scmp.ne.s32.totalorder %s123, %s124
      %p138 = scmp.eq.s32.totalorder %s19, 7
      %p139 = por %p137, %p138
      %p141 = scmp.ne.s32.totalorder %s124, %s140
      %p142 = scmp.eq.s32.totalorder %s19, 0
      %p143 = por %p141, %p142
      %s144 = ssub.s32 %s21, %s35
      %s145 = ssub.s32 %s22, %s31
      %s146 = sor.u32 %s144, %s145
      %s147 = ssub.s32 %s20, %s39
      %s148 = sor.u32 %s146, %s147
      %p149 = scmp.eq.s32.totalorder %s148, 0
      %s151 = sadd.s32 %s150, 1
      %s152 = scalar_select %p149, %s150, %s151
      %p155 = pneg %p149
      %p156 = scmp.eq.s32.totalorder %s13, 7
      %p157 = por %p155, %p156
      %p158 = scmp.ne.s32.totalorder %s150, %s153
      %p159 = scmp.eq.s32.totalorder %s13, 0
      %p160 = por %p158, %p159
      %p161 = scmp.ne.s32.totalorder %s150, %s153
      %p162 = scmp.eq.s32.totalorder %s18, 7
      %p163 = por %p161, %p162
      %p164 = scmp.ne.s32.totalorder %s153, %s154
      %p165 = scmp.eq.s32.totalorder %s18, 0
      %p166 = por %p164, %p165
      %p167 = scmp.ne.s32.totalorder %s153, %s154
      %p168 = scmp.eq.s32.totalorder %s19, 7
      %p169 = por %p167, %p168
      %p171 = scmp.ne.s32.totalorder %s154, %s170
      %p172 = scmp.eq.s32.totalorder %s19, 0
      %p173 = por %p171, %p172
      %p174 = scmp.le.s32.totalorder 1, %s13
      %p175 = scmp.lt.s32.totalorder %s13, 9
      %p176 = pnand %p174, %p175
      %p177 = pneg %p176
      // Predicated region
      $region9: #{tpu_custom_call.1} parent=5 // pred_check
        _
      $region10: #{tpu_custom_call.1} parent=5 // pred_check_branch
        %179 = sbr.rel (%p176) target = $region12
      $region11: #{tpu_custom_call.1} parent=5 // pred_region
        %s180 = ssub.s32 %s13, 1
        // Predicated region
        $region13: #{tpu_custom_call.1} parent=11 // pred_check
          %p181 = pneg %p84
        $region14: #{tpu_custom_call.1} parent=11 // pred_check_branch
          %183 = sbr.rel (%p181) target = $region16
        $region15: #{tpu_custom_call.1} parent=11 // pred_region
          %p184 = scmp.lt.s32.totalorder %s23, 0
          %s185 = scalar_select %p184, %s23, 0
          %s186 = smul.addr %s185, 4
          %s187 = scalar_lea.vmem %s1, %s186
        $region16: #{tpu_custom_call.1} parent=11 // pred_fallthru
          _
        // Predicated region
        $region17: #{tpu_custom_call.1} parent=11 // pred_check
          %p188 = pneg %p110
        $region18: #{tpu_custom_call.1} parent=11 // pred_check_branch
          %190 = sbr.rel (%p188) target = $region20
        $region19: #{tpu_custom_call.1} parent=11 // pred_region
          %p191 = scmp.lt.s32.totalorder %s23, 0
          %s192 = scalar_select %p191, %s23, 0
          %s193 = scalar_lea.vmem %s2, %s192
        $region20: #{tpu_custom_call.1} parent=11 // pred_fallthru
          _
        // Predicated region
        $region21: #{tpu_custom_call.1} parent=11 // pred_check
          %p194 = pneg %p136
        $region22: #{tpu_custom_call.1} parent=11 // pred_check_branch
          %196 = sbr.rel (%p194) target = $region24
        $region23: #{tpu_custom_call.1} parent=11 // pred_region
          %p197 = scmp.lt.s32.totalorder %s23, 0
          %s198 = scalar_select %p197, %s23, 0
          %s199 = scalar_lea.vmem %s3, %s198
        $region24: #{tpu_custom_call.1} parent=11 // pred_fallthru
          _
      $region12: #{tpu_custom_call.1} parent=5 // pred_fallthru
        _
      %p200 = scmp.lt.s32.totalorder %s13, 8
      // Predicated region
      $region25: #{tpu_custom_call.1} parent=5 // pred_check
        %p201 = pneg %p200
      $region26: #{tpu_custom_call.1} parent=5 // pred_check_branch
        %203 = sbr.rel (%p201) target = $region28
      $region27: #{tpu_custom_call.1} parent=5 // pred_region
        // Predicated region
        $region29: #{tpu_custom_call.1} parent=27 // pred_check
          %p204 = pneg %p52
        $region30: #{tpu_custom_call.1} parent=27 // pred_check_branch
          %206 = sbr.rel (%p204) target = $region32
        $region31: #{tpu_custom_call.1} parent=27 // pred_region
          %p207 = scmp.lt.s32.totalorder %s21, 1
          %s208 = scalar_select %p207, %s21, 1
          %s209 = smul.addr %s208, 512
          %s210 = smul.addr %s209, 4
          %s211 = scalar_lea.vmem %s0, %s210
        $region32: #{tpu_custom_call.1} parent=27 // pred_fallthru
          _
      $region28: #{tpu_custom_call.1} parent=5 // pred_fallthru
        _
      %p212 = scmp.le.s32.totalorder 1, %s13
      %p213 = scmp.lt.s32.totalorder %s13, 9
      %p214 = pnand %p212, %p213
      %p215 = pneg %p214
      // Predicated region
      $region33: #{tpu_custom_call.1} parent=5 // pred_check
        _
      $region34: #{tpu_custom_call.1} parent=5 // pred_check_branch
        %217 = sbr.rel (%p214) target = $region36
      $region35: #{tpu_custom_call.1} parent=5 // pred_region
        %s218 = ssub.s32 %s13, 1
        %p219 = scmp.lt.s32.totalorder %s24, 1
        %s220 = scalar_select %p219, %s24, 1
        %s221 = smul.addr %s220, 512
        %s222 = smul.addr %s221, 4
        %s223 = scalar_lea.vmem %s0, %s222
        %p224 = pneg %p58
        %p225 = pneg %p55
        %p226 = scmp.lt.s32.totalorder %s23, 0
        %s227 = scalar_select %p226, %s23, 0
        %s228 = smul.addr %s227, 4
        %s229 = scalar_lea.vmem %s1, %s228
        %p230 = pneg %p84
        %p231 = pneg %p81
        %p232 = scmp.lt.s32.totalorder %s23, 0
        %s233 = scalar_select %p232, %s23, 0
        %s234 = scalar_lea.vmem %s2, %s233
        %p235 = pneg %p110
        %p236 = pneg %p107
        %p237 = scmp.lt.s32.totalorder %s23, 0
        %s238 = scalar_select %p237, %s23, 0
        %s239 = scalar_lea.vmem %s3, %s238
        %p240 = pneg %p136
        %p241 = pneg %p133
        %p242 = pneg %p166
        %p243 = pneg %p163
        %s244 = sand.u32 %s153, 1
        %s245 = scalar_lea.sflag [#allocation3], %s244
        %s246 = sand.u32 %s153, 1
        %s247 = smul.addr %s246, 512
        %s248 = scalar_lea.vmem [#allocation2], %s247
        %p249 = scmp.lt.s32.totalorder %s24, 1
        %s250 = scalar_select %p249, %s24, 1
        %s251 = smul.addr %s250, 512
        %s252 = smul.addr %s251, 4
        %s253 = scalar_lea.vmem %s0, %s252
        %p254 = scmp.lt.s32.totalorder %s23, 0
        %s255 = scalar_select %p254, %s23, 0
        %s256 = smul.addr %s255, 4
        %s257 = scalar_lea.vmem %s1, %s256
        %p258 = scmp.lt.s32.totalorder %s23, 0
        %s259 = scalar_select %p258, %s23, 0
        %s260 = scalar_lea.vmem %s2, %s259
        %p261 = scmp.lt.s32.totalorder %s23, 0
        %s262 = scalar_select %p261, %s23, 0
        %s263 = scalar_lea.vmem %s3, %s262
        %s264 = smul.u32 16, %s25
        %s266 = smul.u32 %s25, 16
        %v267 = vld [vmem:[%s260] sm:$0x1]
        %v268 = vld [vmem:[%s263] sm:$0x1]
        %s269 = smul.u32 %s266, 8
        %s270 = smul.addr %s269, 4
        %s271 = scalar_lea.vmem %s253, %s270
        %v272 = vld [vmem:[%s271] sm:$0xf]
        %v273 = vld [vmem:[%s271 + $0x4] sm:$0xf]
        %v274 = vld [vmem:[%s271 + $0x8] sm:$0xf]
        %v275 = vld [vmem:[%s271 + $0xc] sm:$0xf]
        %v276 = vld [vmem:[%s271 + $0x10] sm:$0xf]
        %v277 = vld [vmem:[%s271 + $0x14] sm:$0xf]
        %v278 = vld [vmem:[%s271 + $0x18] sm:$0xf]
        %v279 = vld [vmem:[%s271 + $0x1c] sm:$0xf]
        %v280 = vld [vmem:[%s271 + $0x20] sm:$0xf]
        %v281 = vld [vmem:[%s271 + $0x24] sm:$0xf]
        %v282 = vld [vmem:[%s271 + $0x28] sm:$0xf]
        %v283 = vld [vmem:[%s271 + $0x2c] sm:$0xf]
        %v284 = vld [vmem:[%s271 + $0x30] sm:$0xf]
        %v285 = vld [vmem:[%s271 + $0x34] sm:$0xf]
        %v286 = vld [vmem:[%s271 + $0x38] sm:$0xf]
        %v287 = vld [vmem:[%s271 + $0x3c] sm:$0xf]
        %v288 = vld [vmem:[%s271 + $0x40] sm:$0xf]
        %v289 = vld [vmem:[%s271 + $0x44] sm:$0xf]
        %v290 = vld [vmem:[%s271 + $0x48] sm:$0xf]
        %v291 = vld [vmem:[%s271 + $0x4c] sm:$0xf]
        %v292 = vld [vmem:[%s271 + $0x50] sm:$0xf]
        %v293 = vld [vmem:[%s271 + $0x54] sm:$0xf]
        %v294 = vld [vmem:[%s271 + $0x58] sm:$0xf]
        %v295 = vld [vmem:[%s271 + $0x5c] sm:$0xf]
        %v296 = vld [vmem:[%s271 + $0x60] sm:$0xf]
        %v297 = vld [vmem:[%s271 + $0x64] sm:$0xf]
        %v298 = vld [vmem:[%s271 + $0x68] sm:$0xf]
        %v299 = vld [vmem:[%s271 + $0x6c] sm:$0xf]
        %v300 = vld [vmem:[%s271 + $0x70] sm:$0xf]
        %v301 = vld [vmem:[%s271 + $0x74] sm:$0xf]
        %v302 = vld [vmem:[%s271 + $0x78] sm:$0xf]
        %v303 = vld [vmem:[%s271 + $0x7c] sm:$0xf]
        %v304 = vld [vmem:[%s257] sm:$0xf]
        %v305 = vld [vmem:[%s257 + $0x4] sm:$0xf]
        %v338 = vunpack.c.l.b16 %v272
        %v339 = vunpack.c.l.b16 %v273
        %v340 = vunpack.c.l.b16 %v274
        %v341 = vunpack.c.l.b16 %v275
        %v342 = vunpack.c.l.b16 %v276
        %v343 = vunpack.c.l.b16 %v277
        %v344 = vunpack.c.l.b16 %v278
        %v345 = vunpack.c.l.b16 %v279
        %v346 = vunpack.c.l.b16 %v280
        %v347 = vunpack.c.l.b16 %v281
        %v348 = vunpack.c.l.b16 %v282
        %v349 = vunpack.c.l.b16 %v283
        %v350 = vunpack.c.l.b16 %v284
        %v351 = vunpack.c.l.b16 %v285
        %v352 = vunpack.c.l.b16 %v286
        %v353 = vunpack.c.l.b16 %v287
        %v354 = vunpack.c.l.b16 %v288
        %v355 = vunpack.c.l.b16 %v289
        %v356 = vunpack.c.l.b16 %v290
        %v357 = vunpack.c.l.b16 %v291
        %v358 = vunpack.c.l.b16 %v292
        %v359 = vunpack.c.l.b16 %v293
        %v360 = vunpack.c.l.b16 %v294
        %v361 = vunpack.c.l.b16 %v295
        %v362 = vunpack.c.l.b16 %v296
        %v363 = vunpack.c.l.b16 %v297
        %v364 = vunpack.c.l.b16 %v298
        %v365 = vunpack.c.l.b16 %v299
        %v366 = vunpack.c.l.b16 %v300
        %v367 = vunpack.c.l.b16 %v301
        %v368 = vunpack.c.l.b16 %v302
        %v369 = vunpack.c.l.b16 %v303
        %v370 = vpack.c.b16 %v339, %v338
        %v371 = vpack.c.b16 %v341, %v340
        %v372 = vpack.c.b16 %v343, %v342
        %v373 = vpack.c.b16 %v345, %v344
        %v374 = vpack.c.b16 %v347, %v346
        %v375 = vpack.c.b16 %v349, %v348
        %v376 = vpack.c.b16 %v351, %v350
        %v377 = vpack.c.b16 %v353, %v352
        %v378 = vpack.c.b16 %v355, %v354
        %v379 = vpack.c.b16 %v357, %v356
        %v380 = vpack.c.b16 %v359, %v358
        %v381 = vpack.c.b16 %v361, %v360
        %v382 = vpack.c.b16 %v363, %v362
        %v383 = vpack.c.b16 %v365, %v364
        %v384 = vpack.c.b16 %v367, %v366
        %v385 = vpack.c.b16 %v369, %v368
        %v388 = vunpack.c.l.b16 %v304
        %v389 = vunpack.c.l.b16 %v305
        %v390 = vpack.c.b16 %v389, %v388
        %vm392 = vcmask 130048
        %v394 = vsel %vm392, %v370, 0
        %v397 = vsel %vm392, %v371, 0
        %v400 = vsel %vm392, %v372, 0
        %v403 = vsel %vm392, %v373, 0
        %v406 = vsel %vm392, %v374, 0
        %v409 = vsel %vm392, %v375, 0
        %v412 = vsel %vm392, %v376, 0
        %v415 = vsel %vm392, %v377, 0
        %v418 = vsel %vm392, %v378, 0
        %v421 = vsel %vm392, %v379, 0
        %v424 = vsel %vm392, %v380, 0
        %v427 = vsel %vm392, %v381, 0
        %v430 = vsel %vm392, %v382, 0
        %v433 = vsel %vm392, %v383, 0
        %v436 = vsel %vm392, %v384, 0
        %v439 = vsel %vm392, %v385, 0
        %441 = vmatpush.bf16.msra.mxu0 0
        %442 = vmatpush.bf16.msra.mxu0 0
        %443 = vmatpush.bf16.msra.mxu0 0
        %444 = vmatpush.bf16.msra.mxu0 0
        %445 = vmatpush.bf16.msra.mxu0 0
        %446 = vmatpush.bf16.msra.mxu0 0
        %447 = vmatpush.bf16.msra.mxu0 0
        %448 = vmatpush.bf16.msra.mxu0 %v390
        %449 = vmatmul.bf16.gmra.mxu0 %v394
        %v450 = vpop.f32.mrf.mxu0
        %v451 = vadd.f32 0.0, %v450
        %v452 = vpop.f32.mrf.mxu0
        %v453 = vadd.f32 0.0, %v452
        %454 = vmatmul.bf16.gmra.mxu0 %v397
        %v455 = vpop.f32.mrf.mxu0
        %v456 = vadd.f32 0.0, %v455
        %v457 = vpop.f32.mrf.mxu0
        %v458 = vadd.f32 0.0, %v457
        %459 = vmatmul.bf16.gmra.mxu0 %v400
        %v460 = vpop.f32.mrf.mxu0
        %v461 = vadd.f32 0.0, %v460
        %v462 = vpop.f32.mrf.mxu0
        %v463 = vadd.f32 0.0, %v462
        %464 = vmatmul.bf16.gmra.mxu0 %v403
        %v465 = vpop.f32.mrf.mxu0
        %v466 = vadd.f32 0.0, %v465
        %v467 = vpop.f32.mrf.mxu0
        %v468 = vadd.f32 0.0, %v467
        %469 = vmatmul.bf16.gmra.mxu0 %v406
        %v470 = vpop.f32.mrf.mxu0
        %v471 = vadd.f32 0.0, %v470
        %v472 = vpop.f32.mrf.mxu0
        %v473 = vadd.f32 0.0, %v472
        %474 = vmatmul.bf16.gmra.mxu0 %v409
        %v475 = vpop.f32.mrf.mxu0
        %v476 = vadd.f32 0.0, %v475
        %v477 = vpop.f32.mrf.mxu0
        %v478 = vadd.f32 0.0, %v477
        %479 = vmatmul.bf16.gmra.mxu0 %v412
        %v480 = vpop.f32.mrf.mxu0
        %v481 = vadd.f32 0.0, %v480
        %v482 = vpop.f32.mrf.mxu0
        %v483 = vadd.f32 0.0, %v482
        %484 = vmatmul.bf16.gmra.mxu0 %v415
        %v485 = vpop.f32.mrf.mxu0
        %v486 = vadd.f32 0.0, %v485
        %v487 = vpop.f32.mrf.mxu0
        %v488 = vadd.f32 0.0, %v487
        %489 = vmatmul.bf16.gmra.mxu0 %v418
        %v490 = vpop.f32.mrf.mxu0
        %v491 = vadd.f32 0.0, %v490
        %v492 = vpop.f32.mrf.mxu0
        %v493 = vadd.f32 0.0, %v492
        %494 = vmatmul.bf16.gmra.mxu0 %v421
        %v495 = vpop.f32.mrf.mxu0
        %v496 = vadd.f32 0.0, %v495
        %v497 = vpop.f32.mrf.mxu0
        %v498 = vadd.f32 0.0, %v497
        %499 = vmatmul.bf16.gmra.mxu0 %v424
        %v500 = vpop.f32.mrf.mxu0
        %v501 = vadd.f32 0.0, %v500
        %v502 = vpop.f32.mrf.mxu0
        %v503 = vadd.f32 0.0, %v502
        %504 = vmatmul.bf16.gmra.mxu0 %v427
        %v505 = vpop.f32.mrf.mxu0
        %v506 = vadd.f32 0.0, %v505
        %v507 = vpop.f32.mrf.mxu0
        %v508 = vadd.f32 0.0, %v507
        %509 = vmatmul.bf16.gmra.mxu0 %v430
        %v510 = vpop.f32.mrf.mxu0
        %v511 = vadd.f32 0.0, %v510
        %v512 = vpop.f32.mrf.mxu0
        %v513 = vadd.f32 0.0, %v512
        %514 = vmatmul.bf16.gmra.mxu0 %v433
        %v515 = vpop.f32.mrf.mxu0
        %v516 = vadd.f32 0.0, %v515
        %v517 = vpop.f32.mrf.mxu0
        %v518 = vadd.f32 0.0, %v517
        %519 = vmatmul.bf16.gmra.mxu0 %v436
        %v520 = vpop.f32.mrf.mxu0
        %v521 = vadd.f32 0.0, %v520
        %v522 = vpop.f32.mrf.mxu0
        %v523 = vadd.f32 0.0, %v522
        %524 = vmatmul.bf16.gmra.mxu0 %v439
        %v525 = vpop.f32.mrf.mxu0
        %v526 = vadd.f32 0.0, %v525
        %v527 = vpop.f32.mrf.mxu0
        %v528 = vadd.f32 0.0, %v527
        %529 = vdwg.mxu0
        %v531 = vperm.slane %v267, 0
        %v533 = vmul.f32 %v451, %v531
        %v534 = vmul.f32 %v453, %v531
        %v535 = vmul.f32 %v456, %v531
        %v536 = vmul.f32 %v458, %v531
        %v537 = vmul.f32 %v461, %v531
        %v538 = vmul.f32 %v463, %v531
        %v539 = vmul.f32 %v466, %v531
        %v540 = vmul.f32 %v468, %v531
        %v541 = vmul.f32 %v471, %v531
        %v542 = vmul.f32 %v473, %v531
        %v543 = vmul.f32 %v476, %v531
        %v544 = vmul.f32 %v478, %v531
        %v545 = vmul.f32 %v481, %v531
        %v546 = vmul.f32 %v483, %v531
        %v547 = vmul.f32 %v486, %v531
        %v548 = vmul.f32 %v488, %v531
        %v549 = vmul.f32 %v491, %v531
        %v550 = vmul.f32 %v493, %v531
        %v551 = vmul.f32 %v496, %v531
        %v552 = vmul.f32 %v498, %v531
        %v553 = vmul.f32 %v501, %v531
        %v554 = vmul.f32 %v503, %v531
        %v555 = vmul.f32 %v506, %v531
        %v556 = vmul.f32 %v508, %v531
        %v557 = vmul.f32 %v511, %v531
        %v558 = vmul.f32 %v513, %v531
        %v559 = vmul.f32 %v516, %v531
        %v560 = vmul.f32 %v518, %v531
        %v561 = vmul.f32 %v521, %v531
        %v562 = vmul.f32 %v523, %v531
        %v563 = vmul.f32 %v526, %v531
        %v564 = vmul.f32 %v528, %v531
        %v566 = vperm.slane %v268, 0
        %v568 = vadd.f32 %v533, %v566
        %v569 = vadd.f32 %v534, %v566
        %v570 = vadd.f32 %v535, %v566
        %v571 = vadd.f32 %v536, %v566
        %v572 = vadd.f32 %v537, %v566
        %v573 = vadd.f32 %v538, %v566
        %v574 = vadd.f32 %v539, %v566
        %v575 = vadd.f32 %v540, %v566
        %v576 = vadd.f32 %v541, %v566
        %v577 = vadd.f32 %v542, %v566
        %v578 = vadd.f32 %v543, %v566
        %v579 = vadd.f32 %v544, %v566
        %v580 = vadd.f32 %v545, %v566
        %v581 = vadd.f32 %v546, %v566
        %v582 = vadd.f32 %v547, %v566
        %v583 = vadd.f32 %v548, %v566
        %v584 = vadd.f32 %v549, %v566
        %v585 = vadd.f32 %v550, %v566
        %v586 = vadd.f32 %v551, %v566
        %v587 = vadd.f32 %v552, %v566
        %v588 = vadd.f32 %v553, %v566
        %v589 = vadd.f32 %v554, %v566
        %v590 = vadd.f32 %v555, %v566
        %v591 = vadd.f32 %v556, %v566
        %v592 = vadd.f32 %v557, %v566
        %v593 = vadd.f32 %v558, %v566
        %v594 = vadd.f32 %v559, %v566
        %v595 = vadd.f32 %v560, %v566
        %v596 = vadd.f32 %v561, %v566
        %v597 = vadd.f32 %v562, %v566
        %v598 = vadd.f32 %v563, %v566
        %v599 = vadd.f32 %v564, %v566
        %v600 = vmax.f32 %v568, 0.0
        %v601 = vmax.f32 %v569, 0.0
        %v602 = vmax.f32 %v570, 0.0
        %v603 = vmax.f32 %v571, 0.0
        %v604 = vmax.f32 %v572, 0.0
        %v605 = vmax.f32 %v573, 0.0
        %v606 = vmax.f32 %v574, 0.0
        %v607 = vmax.f32 %v575, 0.0
        %v608 = vmax.f32 %v576, 0.0
        %v609 = vmax.f32 %v577, 0.0
        %v610 = vmax.f32 %v578, 0.0
        %v611 = vmax.f32 %v579, 0.0
        %v612 = vmax.f32 %v580, 0.0
        %v613 = vmax.f32 %v581, 0.0
        %v614 = vmax.f32 %v582, 0.0
        %v615 = vmax.f32 %v583, 0.0
        %v616 = vmax.f32 %v584, 0.0
        %v617 = vmax.f32 %v585, 0.0
        %v618 = vmax.f32 %v586, 0.0
        %v619 = vmax.f32 %v587, 0.0
        %v620 = vmax.f32 %v588, 0.0
        %v621 = vmax.f32 %v589, 0.0
        %v622 = vmax.f32 %v590, 0.0
        %v623 = vmax.f32 %v591, 0.0
        %v624 = vmax.f32 %v592, 0.0
        %v625 = vmax.f32 %v593, 0.0
        %v626 = vmax.f32 %v594, 0.0
        %v627 = vmax.f32 %v595, 0.0
        %v628 = vmax.f32 %v596, 0.0
        %v629 = vmax.f32 %v597, 0.0
        %v630 = vmax.f32 %v598, 0.0
        %v631 = vmax.f32 %v599, 0.0
        %v632 = vpack.c.bf16 %v600, %v600
        %v633 = vpack.c.bf16 %v601, %v601
        %v634 = vpack.c.bf16 %v602, %v602
        %v635 = vpack.c.bf16 %v603, %v603
        %v636 = vpack.c.bf16 %v604, %v604
        %v637 = vpack.c.bf16 %v605, %v605
        %v638 = vpack.c.bf16 %v606, %v606
        %v639 = vpack.c.bf16 %v607, %v607
        %v640 = vpack.c.bf16 %v608, %v608
        %v641 = vpack.c.bf16 %v609, %v609
        %v642 = vpack.c.bf16 %v610, %v610
        %v643 = vpack.c.bf16 %v611, %v611
        %v644 = vpack.c.bf16 %v612, %v612
        %v645 = vpack.c.bf16 %v613, %v613
        %v646 = vpack.c.bf16 %v614, %v614
        %v647 = vpack.c.bf16 %v615, %v615
        %v648 = vpack.c.bf16 %v616, %v616
        %v649 = vpack.c.bf16 %v617, %v617
        %v650 = vpack.c.bf16 %v618, %v618
        %v651 = vpack.c.bf16 %v619, %v619
        %v652 = vpack.c.bf16 %v620, %v620
        %v653 = vpack.c.bf16 %v621, %v621
        %v654 = vpack.c.bf16 %v622, %v622
        %v655 = vpack.c.bf16 %v623, %v623
        %v656 = vpack.c.bf16 %v624, %v624
        %v657 = vpack.c.bf16 %v625, %v625
        %v658 = vpack.c.bf16 %v626, %v626
        %v659 = vpack.c.bf16 %v627, %v627
        %v660 = vpack.c.bf16 %v628, %v628
        %v661 = vpack.c.bf16 %v629, %v629
        %v662 = vpack.c.bf16 %v630, %v630
        %v663 = vpack.c.bf16 %v631, %v631
        %vm664 = vcmask 519168
        %665 = vst.msk [vmem:[%s248] sm:$0xf] %vm664, %v632
        %666 = vst.msk [vmem:[%s248 + $0x4] sm:$0xf] %vm664, %v633
        %667 = vst.msk [vmem:[%s248 + $0x8] sm:$0xf] %vm664, %v634
        %668 = vst.msk [vmem:[%s248 + $0xc] sm:$0xf] %vm664, %v635
        %669 = vst.msk [vmem:[%s248 + $0x10] sm:$0xf] %vm664, %v636
        %670 = vst.msk [vmem:[%s248 + $0x14] sm:$0xf] %vm664, %v637
        %671 = vst.msk [vmem:[%s248 + $0x18] sm:$0xf] %vm664, %v638
        %672 = vst.msk [vmem:[%s248 + $0x1c] sm:$0xf] %vm664, %v639
        %673 = vst.msk [vmem:[%s248 + $0x20] sm:$0xf] %vm664, %v640
        %674 = vst.msk [vmem:[%s248 + $0x24] sm:$0xf] %vm664, %v641
        %675 = vst.msk [vmem:[%s248 + $0x28] sm:$0xf] %vm664, %v642
        %676 = vst.msk [vmem:[%s248 + $0x2c] sm:$0xf] %vm664, %v643
        %677 = vst.msk [vmem:[%s248 + $0x30] sm:$0xf] %vm664, %v644
        %678 = vst.msk [vmem:[%s248 + $0x34] sm:$0xf] %vm664, %v645
        %679 = vst.msk [vmem:[%s248 + $0x38] sm:$0xf] %vm664, %v646
        %680 = vst.msk [vmem:[%s248 + $0x3c] sm:$0xf] %vm664, %v647
        %681 = vst.msk [vmem:[%s248 + $0x40] sm:$0xf] %vm664, %v648
        %682 = vst.msk [vmem:[%s248 + $0x44] sm:$0xf] %vm664, %v649
        %683 = vst.msk [vmem:[%s248 + $0x48] sm:$0xf] %vm664, %v650
        %684 = vst.msk [vmem:[%s248 + $0x4c] sm:$0xf] %vm664, %v651
        %685 = vst.msk [vmem:[%s248 + $0x50] sm:$0xf] %vm664, %v652
        %686 = vst.msk [vmem:[%s248 + $0x54] sm:$0xf] %vm664, %v653
        %687 = vst.msk [vmem:[%s248 + $0x58] sm:$0xf] %vm664, %v654
        %688 = vst.msk [vmem:[%s248 + $0x5c] sm:$0xf] %vm664, %v655
        %689 = vst.msk [vmem:[%s248 + $0x60] sm:$0xf] %vm664, %v656
        %690 = vst.msk [vmem:[%s248 + $0x64] sm:$0xf] %vm664, %v657
        %691 = vst.msk [vmem:[%s248 + $0x68] sm:$0xf] %vm664, %v658
        %692 = vst.msk [vmem:[%s248 + $0x6c] sm:$0xf] %vm664, %v659
        %693 = vst.msk [vmem:[%s248 + $0x70] sm:$0xf] %vm664, %v660
        %694 = vst.msk [vmem:[%s248 + $0x74] sm:$0xf] %vm664, %v661
        %695 = vst.msk [vmem:[%s248 + $0x78] sm:$0xf] %vm664, %v662
        %696 = vst.msk [vmem:[%s248 + $0x7c] sm:$0xf] %vm664, %v663
        %s697 = sadd.s32 %s266, 4
        %s698 = smul.u32 %s697, 8
        %s699 = smul.addr %s698, 4
        %s700 = scalar_lea.vmem %s253, %s699
        %v701 = vld [vmem:[%s700] sm:$0xf]
        %v702 = vld [vmem:[%s700 + $0x4] sm:$0xf]
        %v703 = vld [vmem:[%s700 + $0x8] sm:$0xf]
        %v704 = vld [vmem:[%s700 + $0xc] sm:$0xf]
        %v705 = vld [vmem:[%s700 + $0x10] sm:$0xf]
        %v706 = vld [vmem:[%s700 + $0x14] sm:$0xf]
        %v707 = vld [vmem:[%s700 + $0x18] sm:$0xf]
        %v708 = vld [vmem:[%s700 + $0x1c] sm:$0xf]
        %v709 = vld [vmem:[%s700 + $0x20] sm:$0xf]
        %v710 = vld [vmem:[%s700 + $0x24] sm:$0xf]
        %v711 = vld [vmem:[%s700 + $0x28] sm:$0xf]
        %v712 = vld [vmem:[%s700 + $0x2c] sm:$0xf]
        %v713 = vld [vmem:[%s700 + $0x30] sm:$0xf]
        %v714 = vld [vmem:[%s700 + $0x34] sm:$0xf]
        %v715 = vld [vmem:[%s700 + $0x38] sm:$0xf]
        %v716 = vld [vmem:[%s700 + $0x3c] sm:$0xf]
        %v717 = vld [vmem:[%s700 + $0x40] sm:$0xf]
        %v718 = vld [vmem:[%s700 + $0x44] sm:$0xf]
        %v719 = vld [vmem:[%s700 + $0x48] sm:$0xf]
        %v720 = vld [vmem:[%s700 + $0x4c] sm:$0xf]
        %v721 = vld [vmem:[%s700 + $0x50] sm:$0xf]
        %v722 = vld [vmem:[%s700 + $0x54] sm:$0xf]
        %v723 = vld [vmem:[%s700 + $0x58] sm:$0xf]
        %v724 = vld [vmem:[%s700 + $0x5c] sm:$0xf]
        %v725 = vld [vmem:[%s700 + $0x60] sm:$0xf]
        %v726 = vld [vmem:[%s700 + $0x64] sm:$0xf]
        %v727 = vld [vmem:[%s700 + $0x68] sm:$0xf]
        %v728 = vld [vmem:[%s700 + $0x6c] sm:$0xf]
        %v729 = vld [vmem:[%s700 + $0x70] sm:$0xf]
        %v730 = vld [vmem:[%s700 + $0x74] sm:$0xf]
        %v731 = vld [vmem:[%s700 + $0x78] sm:$0xf]
        %v732 = vld [vmem:[%s700 + $0x7c] sm:$0xf]
        %v733 = vld [vmem:[%s257] sm:$0xf]
        %v734 = vld [vmem:[%s257 + $0x4] sm:$0xf]
        %v767 = vunpack.c.l.b16 %v701
        %v768 = vunpack.c.l.b16 %v702
        %v769 = vunpack.c.l.b16 %v703
        %v770 = vunpack.c.l.b16 %v704
        %v771 = vunpack.c.l.b16 %v705
        %v772 = vunpack.c.l.b16 %v706
        %v773 = vunpack.c.l.b16 %v707
        %v774 = vunpack.c.l.b16 %v708
        %v775 = vunpack.c.l.b16 %v709
        %v776 = vunpack.c.l.b16 %v710
        %v777 = vunpack.c.l.b16 %v711
        %v778 = vunpack.c.l.b16 %v712
        %v779 = vunpack.c.l.b16 %v713
        %v780 = vunpack.c.l.b16 %v714
        %v781 = vunpack.c.l.b16 %v715
        %v782 = vunpack.c.l.b16 %v716
        %v783 = vunpack.c.l.b16 %v717
        %v784 = vunpack.c.l.b16 %v718
        %v785 = vunpack.c.l.b16 %v719
        %v786 = vunpack.c.l.b16 %v720
        %v787 = vunpack.c.l.b16 %v721
        %v788 = vunpack.c.l.b16 %v722
        %v789 = vunpack.c.l.b16 %v723
        %v790 = vunpack.c.l.b16 %v724
        %v791 = vunpack.c.l.b16 %v725
        %v792 = vunpack.c.l.b16 %v726
        %v793 = vunpack.c.l.b16 %v727
        %v794 = vunpack.c.l.b16 %v728
        %v795 = vunpack.c.l.b16 %v729
        %v796 = vunpack.c.l.b16 %v730
        %v797 = vunpack.c.l.b16 %v731
        %v798 = vunpack.c.l.b16 %v732
        %v799 = vpack.c.b16 %v768, %v767
        %v800 = vpack.c.b16 %v770, %v769
        %v801 = vpack.c.b16 %v772, %v771
        %v802 = vpack.c.b16 %v774, %v773
        %v803 = vpack.c.b16 %v776, %v775
        %v804 = vpack.c.b16 %v778, %v777
        %v805 = vpack.c.b16 %v780, %v779
        %v806 = vpack.c.b16 %v782, %v781
        %v807 = vpack.c.b16 %v784, %v783
        %v808 = vpack.c.b16 %v786, %v785
        %v809 = vpack.c.b16 %v788, %v787
        %v810 = vpack.c.b16 %v790, %v789
        %v811 = vpack.c.b16 %v792, %v791
        %v812 = vpack.c.b16 %v794, %v793
        %v813 = vpack.c.b16 %v796, %v795
        %v814 = vpack.c.b16 %v798, %v797
        %v817 = vunpack.c.l.b16 %v733
        %v818 = vunpack.c.l.b16 %v734
        %v819 = vpack.c.b16 %v818, %v817
        %v822 = vsel %vm392, %v799, 0
        %v825 = vsel %vm392, %v800, 0
        %v828 = vsel %vm392, %v801, 0
        %v831 = vsel %vm392, %v802, 0
        %v834 = vsel %vm392, %v803, 0
        %v837 = vsel %vm392, %v804, 0
        %v840 = vsel %vm392, %v805, 0
        %v843 = vsel %vm392, %v806, 0
        %v846 = vsel %vm392, %v807, 0
        %v849 = vsel %vm392, %v808, 0
        %v852 = vsel %vm392, %v809, 0
        %v855 = vsel %vm392, %v810, 0
        %v858 = vsel %vm392, %v811, 0
        %v861 = vsel %vm392, %v812, 0
        %v864 = vsel %vm392, %v813, 0
        %v867 = vsel %vm392, %v814, 0
        %869 = vmatpush.bf16.msra.mxu0 0
        %870 = vmatpush.bf16.msra.mxu0 0
        %871 = vmatpush.bf16.msra.mxu0 0
        %872 = vmatpush.bf16.msra.mxu0 0
        %873 = vmatpush.bf16.msra.mxu0 0
        %874 = vmatpush.bf16.msra.mxu0 0
        %875 = vmatpush.bf16.msra.mxu0 0
        %876 = vmatpush.bf16.msra.mxu0 %v819
        %877 = vmatmul.bf16.gmra.mxu0 %v822
        %v878 = vpop.f32.mrf.mxu0
        %v879 = vadd.f32 0.0, %v878
        %v880 = vpop.f32.mrf.mxu0
        %v881 = vadd.f32 0.0, %v880
        %882 = vmatmul.bf16.gmra.mxu0 %v825
        %v883 = vpop.f32.mrf.mxu0
        %v884 = vadd.f32 0.0, %v883
        %v885 = vpop.f32.mrf.mxu0
        %v886 = vadd.f32 0.0, %v885
        %887 = vmatmul.bf16.gmra.mxu0 %v828
        %v888 = vpop.f32.mrf.mxu0
        %v889 = vadd.f32 0.0, %v888
        %v890 = vpop.f32.mrf.mxu0
        %v891 = vadd.f32 0.0, %v890
        %892 = vmatmul.bf16.gmra.mxu0 %v831
        %v893 = vpop.f32.mrf.mxu0
        %v894 = vadd.f32 0.0, %v893
        %v895 = vpop.f32.mrf.mxu0
        %v896 = vadd.f32 0.0, %v895
        %897 = vmatmul.bf16.gmra.mxu0 %v834
        %v898 = vpop.f32.mrf.mxu0
        %v899 = vadd.f32 0.0, %v898
        %v900 = vpop.f32.mrf.mxu0
        %v901 = vadd.f32 0.0, %v900
        %902 = vmatmul.bf16.gmra.mxu0 %v837
        %v903 = vpop.f32.mrf.mxu0
        %v904 = vadd.f32 0.0, %v903
        %v905 = vpop.f32.mrf.mxu0
        %v906 = vadd.f32 0.0, %v905
        %907 = vmatmul.bf16.gmra.mxu0 %v840
        %v908 = vpop.f32.mrf.mxu0
        %v909 = vadd.f32 0.0, %v908
        %v910 = vpop.f32.mrf.mxu0
        %v911 = vadd.f32 0.0, %v910
        %912 = vmatmul.bf16.gmra.mxu0 %v843
        %v913 = vpop.f32.mrf.mxu0
        %v914 = vadd.f32 0.0, %v913
        %v915 = vpop.f32.mrf.mxu0
        %v916 = vadd.f32 0.0, %v915
        %917 = vmatmul.bf16.gmra.mxu0 %v846
        %v918 = vpop.f32.mrf.mxu0
        %v919 = vadd.f32 0.0, %v918
        %v920 = vpop.f32.mrf.mxu0
        %v921 = vadd.f32 0.0, %v920
        %922 = vmatmul.bf16.gmra.mxu0 %v849
        %v923 = vpop.f32.mrf.mxu0
        %v924 = vadd.f32 0.0, %v923
        %v925 = vpop.f32.mrf.mxu0
        %v926 = vadd.f32 0.0, %v925
        %927 = vmatmul.bf16.gmra.mxu0 %v852
        %v928 = vpop.f32.mrf.mxu0
        %v929 = vadd.f32 0.0, %v928
        %v930 = vpop.f32.mrf.mxu0
        %v931 = vadd.f32 0.0, %v930
        %932 = vmatmul.bf16.gmra.mxu0 %v855
        %v933 = vpop.f32.mrf.mxu0
        %v934 = vadd.f32 0.0, %v933
        %v935 = vpop.f32.mrf.mxu0
        %v936 = vadd.f32 0.0, %v935
        %937 = vmatmul.bf16.gmra.mxu0 %v858
        %v938 = vpop.f32.mrf.mxu0
        %v939 = vadd.f32 0.0, %v938
        %v940 = vpop.f32.mrf.mxu0
        %v941 = vadd.f32 0.0, %v940
        %942 = vmatmul.bf16.gmra.mxu0 %v861
        %v943 = vpop.f32.mrf.mxu0
        %v944 = vadd.f32 0.0, %v943
        %v945 = vpop.f32.mrf.mxu0
        %v946 = vadd.f32 0.0, %v945
        %947 = vmatmul.bf16.gmra.mxu0 %v864
        %v948 = vpop.f32.mrf.mxu0
        %v949 = vadd.f32 0.0, %v948
        %v950 = vpop.f32.mrf.mxu0
        %v951 = vadd.f32 0.0, %v950
        %952 = vmatmul.bf16.gmra.mxu0 %v867
        %v953 = vpop.f32.mrf.mxu0
        %v954 = vadd.f32 0.0, %v953
        %v955 = vpop.f32.mrf.mxu0
        %v956 = vadd.f32 0.0, %v955
        %957 = vdwg.mxu0
        %v958 = vmul.f32 %v879, %v531
        %v959 = vmul.f32 %v881, %v531
        %v960 = vmul.f32 %v884, %v531
        %v961 = vmul.f32 %v886, %v531
        %v962 = vmul.f32 %v889, %v531
        %v963 = vmul.f32 %v891, %v531
        %v964 = vmul.f32 %v894, %v531
        %v965 = vmul.f32 %v896, %v531
        %v966 = vmul.f32 %v899, %v531
        %v967 = vmul.f32 %v901, %v531
        %v968 = vmul.f32 %v904, %v531
        %v969 = vmul.f32 %v906, %v531
        %v970 = vmul.f32 %v909, %v531
        %v971 = vmul.f32 %v911, %v531
        %v972 = vmul.f32 %v914, %v531
        %v973 = vmul.f32 %v916, %v531
        %v974 = vmul.f32 %v919, %v531
        %v975 = vmul.f32 %v921, %v531
        %v976 = vmul.f32 %v924, %v531
        %v977 = vmul.f32 %v926, %v531
        %v978 = vmul.f32 %v929, %v531
        %v979 = vmul.f32 %v931, %v531
        %v980 = vmul.f32 %v934, %v531
        %v981 = vmul.f32 %v936, %v531
        %v982 = vmul.f32 %v939, %v531
        %v983 = vmul.f32 %v941, %v531
        %v984 = vmul.f32 %v944, %v531
        %v985 = vmul.f32 %v946, %v531
        %v986 = vmul.f32 %v949, %v531
        %v987 = vmul.f32 %v951, %v531
        %v988 = vmul.f32 %v954, %v531
        %v989 = vmul.f32 %v956, %v531
        %v990 = vadd.f32 %v958, %v566
        %v991 = vadd.f32 %v959, %v566
        %v992 = vadd.f32 %v960, %v566
        %v993 = vadd.f32 %v961, %v566
        %v994 = vadd.f32 %v962, %v566
        %v995 = vadd.f32 %v963, %v566
        %v996 = vadd.f32 %v964, %v566
        %v997 = vadd.f32 %v965, %v566
        %v998 = vadd.f32 %v966, %v566
        %v999 = vadd.f32 %v967, %v566
        %v1000 = vadd.f32 %v968, %v566
        %v1001 = vadd.f32 %v969, %v566
        %v1002 = vadd.f32 %v970, %v566
        %v1003 = vadd.f32 %v971, %v566
        %v1004 = vadd.f32 %v972, %v566
        %v1005 = vadd.f32 %v973, %v566
        %v1006 = vadd.f32 %v974, %v566
        %v1007 = vadd.f32 %v975, %v566
        %v1008 = vadd.f32 %v976, %v566
        %v1009 = vadd.f32 %v977, %v566
        %v1010 = vadd.f32 %v978, %v566
        %v1011 = vadd.f32 %v979, %v566
        %v1012 = vadd.f32 %v980, %v566
        %v1013 = vadd.f32 %v981, %v566
        %v1014 = vadd.f32 %v982, %v566
        %v1015 = vadd.f32 %v983, %v566
        %v1016 = vadd.f32 %v984, %v566
        %v1017 = vadd.f32 %v985, %v566
        %v1018 = vadd.f32 %v986, %v566
        %v1019 = vadd.f32 %v987, %v566
        %v1020 = vadd.f32 %v988, %v566
        %v1021 = vadd.f32 %v989, %v566
        %v1022 = vmax.f32 %v990, 0.0
        %v1023 = vmax.f32 %v991, 0.0
        %v1024 = vmax.f32 %v992, 0.0
        %v1025 = vmax.f32 %v993, 0.0
        %v1026 = vmax.f32 %v994, 0.0
        %v1027 = vmax.f32 %v995, 0.0
        %v1028 = vmax.f32 %v996, 0.0
        %v1029 = vmax.f32 %v997, 0.0
        %v1030 = vmax.f32 %v998, 0.0
        %v1031 = vmax.f32 %v999, 0.0
        %v1032 = vmax.f32 %v1000, 0.0
        %v1033 = vmax.f32 %v1001, 0.0
        %v1034 = vmax.f32 %v1002, 0.0
        %v1035 = vmax.f32 %v1003, 0.0
        %v1036 = vmax.f32 %v1004, 0.0
        %v1037 = vmax.f32 %v1005, 0.0
        %v1038 = vmax.f32 %v1006, 0.0
        %v1039 = vmax.f32 %v1007, 0.0
        %v1040 = vmax.f32 %v1008, 0.0
        %v1041 = vmax.f32 %v1009, 0.0
        %v1042 = vmax.f32 %v1010, 0.0
        %v1043 = vmax.f32 %v1011, 0.0
        %v1044 = vmax.f32 %v1012, 0.0
        %v1045 = vmax.f32 %v1013, 0.0
        %v1046 = vmax.f32 %v1014, 0.0
        %v1047 = vmax.f32 %v1015, 0.0
        %v1048 = vmax.f32 %v1016, 0.0
        %v1049 = vmax.f32 %v1017, 0.0
        %v1050 = vmax.f32 %v1018, 0.0
        %v1051 = vmax.f32 %v1019, 0.0
        %v1052 = vmax.f32 %v1020, 0.0
        %v1053 = vmax.f32 %v1021, 0.0
        %v1054 = vpack.c.bf16 %v1022, %v1022
        %v1055 = vpack.c.bf16 %v1023, %v1023
        %v1056 = vpack.c.bf16 %v1024, %v1024
        %v1057 = vpack.c.bf16 %v1025, %v1025
        %v1058 = vpack.c.bf16 %v1026, %v1026
        %v1059 = vpack.c.bf16 %v1027, %v1027
        %v1060 = vpack.c.bf16 %v1028, %v1028
        %v1061 = vpack.c.bf16 %v1029, %v1029
        %v1062 = vpack.c.bf16 %v1030, %v1030
        %v1063 = vpack.c.bf16 %v1031, %v1031
        %v1064 = vpack.c.bf16 %v1032, %v1032
        %v1065 = vpack.c.bf16 %v1033, %v1033
        %v1066 = vpack.c.bf16 %v1034, %v1034
        %v1067 = vpack.c.bf16 %v1035, %v1035
        %v1068 = vpack.c.bf16 %v1036, %v1036
        %v1069 = vpack.c.bf16 %v1037, %v1037
        %v1070 = vpack.c.bf16 %v1038, %v1038
        %v1071 = vpack.c.bf16 %v1039, %v1039
        %v1072 = vpack.c.bf16 %v1040, %v1040
        %v1073 = vpack.c.bf16 %v1041, %v1041
        %v1074 = vpack.c.bf16 %v1042, %v1042
        %v1075 = vpack.c.bf16 %v1043, %v1043
        %v1076 = vpack.c.bf16 %v1044, %v1044
        %v1077 = vpack.c.bf16 %v1045, %v1045
        %v1078 = vpack.c.bf16 %v1046, %v1046
        %v1079 = vpack.c.bf16 %v1047, %v1047
        %v1080 = vpack.c.bf16 %v1048, %v1048
        %v1081 = vpack.c.bf16 %v1049, %v1049
        %v1082 = vpack.c.bf16 %v1050, %v1050
        %v1083 = vpack.c.bf16 %v1051, %v1051
        %v1084 = vpack.c.bf16 %v1052, %v1052
        %v1085 = vpack.c.bf16 %v1053, %v1053
        %s1086 = scalar_lea.vmem %s248, 128 [#allocation2]
        %1087 = vst.msk [vmem:[%s1086] sm:$0xf] %vm664, %v1054
        %1088 = vst.msk [vmem:[%s1086 + $0x4] sm:$0xf] %vm664, %v1055
        %1089 = vst.msk [vmem:[%s1086 + $0x8] sm:$0xf] %vm664, %v1056
        %1090 = vst.msk [vmem:[%s1086 + $0xc] sm:$0xf] %vm664, %v1057
        %1091 = vst.msk [vmem:[%s1086 + $0x10] sm:$0xf] %vm664, %v1058
        %1092 = vst.msk [vmem:[%s1086 + $0x14] sm:$0xf] %vm664, %v1059
        %1093 = vst.msk [vmem:[%s1086 + $0x18] sm:$0xf] %vm664, %v1060
        %1094 = vst.msk [vmem:[%s1086 + $0x1c] sm:$0xf] %vm664, %v1061
        %1095 = vst.msk [vmem:[%s1086 + $0x20] sm:$0xf] %vm664, %v1062
        %1096 = vst.msk [vmem:[%s1086 + $0x24] sm:$0xf] %vm664, %v1063
        %1097 = vst.msk [vmem:[%s1086 + $0x28] sm:$0xf] %vm664, %v1064
        %1098 = vst.msk [vmem:[%s1086 + $0x2c] sm:$0xf] %vm664, %v1065
        %1099 = vst.msk [vmem:[%s1086 + $0x30] sm:$0xf] %vm664, %v1066
        %1100 = vst.msk [vmem:[%s1086 + $0x34] sm:$0xf] %vm664, %v1067
        %1101 = vst.msk [vmem:[%s1086 + $0x38] sm:$0xf] %vm664, %v1068
        %1102 = vst.msk [vmem:[%s1086 + $0x3c] sm:$0xf] %vm664, %v1069
        %1103 = vst.msk [vmem:[%s1086 + $0x40] sm:$0xf] %vm664, %v1070
        %1104 = vst.msk [vmem:[%s1086 + $0x44] sm:$0xf] %vm664, %v1071
        %1105 = vst.msk [vmem:[%s1086 + $0x48] sm:$0xf] %vm664, %v1072
        %1106 = vst.msk [vmem:[%s1086 + $0x4c] sm:$0xf] %vm664, %v1073
        %1107 = vst.msk [vmem:[%s1086 + $0x50] sm:$0xf] %vm664, %v1074
        %1108 = vst.msk [vmem:[%s1086 + $0x54] sm:$0xf] %vm664, %v1075
        %1109 = vst.msk [vmem:[%s1086 + $0x58] sm:$0xf] %vm664, %v1076
        %1110 = vst.msk [vmem:[%s1086 + $0x5c] sm:$0xf] %vm664, %v1077
        %1111 = vst.msk [vmem:[%s1086 + $0x60] sm:$0xf] %vm664, %v1078
        %1112 = vst.msk [vmem:[%s1086 + $0x64] sm:$0xf] %vm664, %v1079
        %1113 = vst.msk [vmem:[%s1086 + $0x68] sm:$0xf] %vm664, %v1080
        %1114 = vst.msk [vmem:[%s1086 + $0x6c] sm:$0xf] %vm664, %v1081
        %1115 = vst.msk [vmem:[%s1086 + $0x70] sm:$0xf] %vm664, %v1082
        %1116 = vst.msk [vmem:[%s1086 + $0x74] sm:$0xf] %vm664, %v1083
        %1117 = vst.msk [vmem:[%s1086 + $0x78] sm:$0xf] %vm664, %v1084
        %1118 = vst.msk [vmem:[%s1086 + $0x7c] sm:$0xf] %vm664, %v1085
        %s1119 = sadd.s32 %s266, 8
        %s1120 = smul.u32 %s1119, 8
        %s1121 = smul.addr %s1120, 4
        %s1122 = scalar_lea.vmem %s253, %s1121
        %v1123 = vld [vmem:[%s1122] sm:$0xf]
        %v1124 = vld [vmem:[%s1122 + $0x4] sm:$0xf]
        %v1125 = vld [vmem:[%s1122 + $0x8] sm:$0xf]
        %v1126 = vld [vmem:[%s1122 + $0xc] sm:$0xf]
        %v1127 = vld [vmem:[%s1122 + $0x10] sm:$0xf]
        %v1128 = vld [vmem:[%s1122 + $0x14] sm:$0xf]
        %v1129 = vld [vmem:[%s1122 + $0x18] sm:$0xf]
        %v1130 = vld [vmem:[%s1122 + $0x1c] sm:$0xf]
        %v1131 = vld [vmem:[%s1122 + $0x20] sm:$0xf]
        %v1132 = vld [vmem:[%s1122 + $0x24] sm:$0xf]
        %v1133 = vld [vmem:[%s1122 + $0x28] sm:$0xf]
        %v1134 = vld [vmem:[%s1122 + $0x2c] sm:$0xf]
        %v1135 = vld [vmem:[%s1122 + $0x30] sm:$0xf]
        %v1136 = vld [vmem:[%s1122 + $0x34] sm:$0xf]
        %v1137 = vld [vmem:[%s1122 + $0x38] sm:$0xf]
        %v1138 = vld [vmem:[%s1122 + $0x3c] sm:$0xf]
        %v1139 = vld [vmem:[%s1122 + $0x40] sm:$0xf]
        %v1140 = vld [vmem:[%s1122 + $0x44] sm:$0xf]
        %v1141 = vld [vmem:[%s1122 + $0x48] sm:$0xf]
        %v1142 = vld [vmem:[%s1122 + $0x4c] sm:$0xf]
        %v1143 = vld [vmem:[%s1122 + $0x50] sm:$0xf]
        %v1144 = vld [vmem:[%s1122 + $0x54] sm:$0xf]
        %v1145 = vld [vmem:[%s1122 + $0x58] sm:$0xf]
        %v1146 = vld [vmem:[%s1122 + $0x5c] sm:$0xf]
        %v1147 = vld [vmem:[%s1122 + $0x60] sm:$0xf]
        %v1148 = vld [vmem:[%s1122 + $0x64] sm:$0xf]
        %v1149 = vld [vmem:[%s1122 + $0x68] sm:$0xf]
        %v1150 = vld [vmem:[%s1122 + $0x6c] sm:$0xf]
        %v1151 = vld [vmem:[%s1122 + $0x70] sm:$0xf]
        %v1152 = vld [vmem:[%s1122 + $0x74] sm:$0xf]
        %v1153 = vld [vmem:[%s1122 + $0x78] sm:$0xf]
        %v1154 = vld [vmem:[%s1122 + $0x7c] sm:$0xf]
        %v1155 = vld [vmem:[%s257] sm:$0xf]
        %v1156 = vld [vmem:[%s257 + $0x4] sm:$0xf]
        %v1189 = vunpack.c.l.b16 %v1123
        %v1190 = vunpack.c.l.b16 %v1124
        %v1191 = vunpack.c.l.b16 %v1125
        %v1192 = vunpack.c.l.b16 %v1126
        %v1193 = vunpack.c.l.b16 %v1127
        %v1194 = vunpack.c.l.b16 %v1128
        %v1195 = vunpack.c.l.b16 %v1129
        %v1196 = vunpack.c.l.b16 %v1130
        %v1197 = vunpack.c.l.b16 %v1131
        %v1198 = vunpack.c.l.b16 %v1132
        %v1199 = vunpack.c.l.b16 %v1133
        %v1200 = vunpack.c.l.b16 %v1134
        %v1201 = vunpack.c.l.b16 %v1135
        %v1202 = vunpack.c.l.b16 %v1136
        %v1203 = vunpack.c.l.b16 %v1137
        %v1204 = vunpack.c.l.b16 %v1138
        %v1205 = vunpack.c.l.b16 %v1139
        %v1206 = vunpack.c.l.b16 %v1140
        %v1207 = vunpack.c.l.b16 %v1141
        %v1208 = vunpack.c.l.b16 %v1142
        %v1209 = vunpack.c.l.b16 %v1143
        %v1210 = vunpack.c.l.b16 %v1144
        %v1211 = vunpack.c.l.b16 %v1145
        %v1212 = vunpack.c.l.b16 %v1146
        %v1213 = vunpack.c.l.b16 %v1147
        %v1214 = vunpack.c.l.b16 %v1148
        %v1215 = vunpack.c.l.b16 %v1149
        %v1216 = vunpack.c.l.b16 %v1150
        %v1217 = vunpack.c.l.b16 %v1151
        %v1218 = vunpack.c.l.b16 %v1152
        %v1219 = vunpack.c.l.b16 %v1153
        %v1220 = vunpack.c.l.b16 %v1154
        %v1221 = vpack.c.b16 %v1190, %v1189
        %v1222 = vpack.c.b16 %v1192, %v1191
        %v1223 = vpack.c.b16 %v1194, %v1193
        %v1224 = vpack.c.b16 %v1196, %v1195
        %v1225 = vpack.c.b16 %v1198, %v1197
        %v1226 = vpack.c.b16 %v1200, %v1199
        %v1227 = vpack.c.b16 %v1202, %v1201
        %v1228 = vpack.c.b16 %v1204, %v1203
        %v1229 = vpack.c.b16 %v1206, %v1205
        %v1230 = vpack.c.b16 %v1208, %v1207
        %v1231 = vpack.c.b16 %v1210, %v1209
        %v1232 = vpack.c.b16 %v1212, %v1211
        %v1233 = vpack.c.b16 %v1214, %v1213
        %v1234 = vpack.c.b16 %v1216, %v1215
        %v1235 = vpack.c.b16 %v1218, %v1217
        %v1236 = vpack.c.b16 %v1220, %v1219
        %v1239 = vunpack.c.l.b16 %v1155
        %v1240 = vunpack.c.l.b16 %v1156
        %v1241 = vpack.c.b16 %v1240, %v1239
        %v1244 = vsel %vm392, %v1221, 0
        %v1247 = vsel %vm392, %v1222, 0
        %v1250 = vsel %vm392, %v1223, 0
        %v1253 = vsel %vm392, %v1224, 0
        %v1256 = vsel %vm392, %v1225, 0
        %v1259 = vsel %vm392, %v1226, 0
        %v1262 = vsel %vm392, %v1227, 0
        %v1265 = vsel %vm392, %v1228, 0
        %v1268 = vsel %vm392, %v1229, 0
        %v1271 = vsel %vm392, %v1230, 0
        %v1274 = vsel %vm392, %v1231, 0
        %v1277 = vsel %vm392, %v1232, 0
        %v1280 = vsel %vm392, %v1233, 0
        %v1283 = vsel %vm392, %v1234, 0
        %v1286 = vsel %vm392, %v1235, 0
        %v1289 = vsel %vm392, %v1236, 0
        %1291 = vmatpush.bf16.msra.mxu0 0
        %1292 = vmatpush.bf16.msra.mxu0 0
        %1293 = vmatpush.bf16.msra.mxu0 0
        %1294 = vmatpush.bf16.msra.mxu0 0
        %1295 = vmatpush.bf16.msra.mxu0 0
        %1296 = vmatpush.bf16.msra.mxu0 0
        %1297 = vmatpush.bf16.msra.mxu0 0
        %1298 = vmatpush.bf16.msra.mxu0 %v1241
        %1299 = vmatmul.bf16.gmra.mxu0 %v1244
        %v1300 = vpop.f32.mrf.mxu0
        %v1301 = vadd.f32 0.0, %v1300
        %v1302 = vpop.f32.mrf.mxu0
        %v1303 = vadd.f32 0.0, %v1302
        %1304 = vmatmul.bf16.gmra.mxu0 %v1247
        %v1305 = vpop.f32.mrf.mxu0
        %v1306 = vadd.f32 0.0, %v1305
        %v1307 = vpop.f32.mrf.mxu0
        %v1308 = vadd.f32 0.0, %v1307
        %1309 = vmatmul.bf16.gmra.mxu0 %v1250
        %v1310 = vpop.f32.mrf.mxu0
        %v1311 = vadd.f32 0.0, %v1310
        %v1312 = vpop.f32.mrf.mxu0
        %v1313 = vadd.f32 0.0, %v1312
        %1314 = vmatmul.bf16.gmra.mxu0 %v1253
        %v1315 = vpop.f32.mrf.mxu0
        %v1316 = vadd.f32 0.0, %v1315
        %v1317 = vpop.f32.mrf.mxu0
        %v1318 = vadd.f32 0.0, %v1317
        %1319 = vmatmul.bf16.gmra.mxu0 %v1256
        %v1320 = vpop.f32.mrf.mxu0
        %v1321 = vadd.f32 0.0, %v1320
        %v1322 = vpop.f32.mrf.mxu0
        %v1323 = vadd.f32 0.0, %v1322
        %1324 = vmatmul.bf16.gmra.mxu0 %v1259
        %v1325 = vpop.f32.mrf.mxu0
        %v1326 = vadd.f32 0.0, %v1325
        %v1327 = vpop.f32.mrf.mxu0
        %v1328 = vadd.f32 0.0, %v1327
        %1329 = vmatmul.bf16.gmra.mxu0 %v1262
        %v1330 = vpop.f32.mrf.mxu0
        %v1331 = vadd.f32 0.0, %v1330
        %v1332 = vpop.f32.mrf.mxu0
        %v1333 = vadd.f32 0.0, %v1332
        %1334 = vmatmul.bf16.gmra.mxu0 %v1265
        %v1335 = vpop.f32.mrf.mxu0
        %v1336 = vadd.f32 0.0, %v1335
        %v1337 = vpop.f32.mrf.mxu0
        %v1338 = vadd.f32 0.0, %v1337
        %1339 = vmatmul.bf16.gmra.mxu0 %v1268
        %v1340 = vpop.f32.mrf.mxu0
        %v1341 = vadd.f32 0.0, %v1340
        %v1342 = vpop.f32.mrf.mxu0
        %v1343 = vadd.f32 0.0, %v1342
        %1344 = vmatmul.bf16.gmra.mxu0 %v1271
        %v1345 = vpop.f32.mrf.mxu0
        %v1346 = vadd.f32 0.0, %v1345
        %v1347 = vpop.f32.mrf.mxu0
        %v1348 = vadd.f32 0.0, %v1347
        %1349 = vmatmul.bf16.gmra.mxu0 %v1274
        %v1350 = vpop.f32.mrf.mxu0
        %v1351 = vadd.f32 0.0, %v1350
        %v1352 = vpop.f32.mrf.mxu0
        %v1353 = vadd.f32 0.0, %v1352
        %1354 = vmatmul.bf16.gmra.mxu0 %v1277
        %v1355 = vpop.f32.mrf.mxu0
        %v1356 = vadd.f32 0.0, %v1355
        %v1357 = vpop.f32.mrf.mxu0
        %v1358 = vadd.f32 0.0, %v1357
        %1359 = vmatmul.bf16.gmra.mxu0 %v1280
        %v1360 = vpop.f32.mrf.mxu0
        %v1361 = vadd.f32 0.0, %v1360
        %v1362 = vpop.f32.mrf.mxu0
        %v1363 = vadd.f32 0.0, %v1362
        %1364 = vmatmul.bf16.gmra.mxu0 %v1283
        %v1365 = vpop.f32.mrf.mxu0
        %v1366 = vadd.f32 0.0, %v1365
        %v1367 = vpop.f32.mrf.mxu0
        %v1368 = vadd.f32 0.0, %v1367
        %1369 = vmatmul.bf16.gmra.mxu0 %v1286
        %v1370 = vpop.f32.mrf.mxu0
        %v1371 = vadd.f32 0.0, %v1370
        %v1372 = vpop.f32.mrf.mxu0
        %v1373 = vadd.f32 0.0, %v1372
        %1374 = vmatmul.bf16.gmra.mxu0 %v1289
        %v1375 = vpop.f32.mrf.mxu0
        %v1376 = vadd.f32 0.0, %v1375
        %v1377 = vpop.f32.mrf.mxu0
        %v1378 = vadd.f32 0.0, %v1377
        %1379 = vdwg.mxu0
        %v1380 = vmul.f32 %v1301, %v531
        %v1381 = vmul.f32 %v1303, %v531
        %v1382 = vmul.f32 %v1306, %v531
        %v1383 = vmul.f32 %v1308, %v531
        %v1384 = vmul.f32 %v1311, %v531
        %v1385 = vmul.f32 %v1313, %v531
        %v1386 = vmul.f32 %v1316, %v531
        %v1387 = vmul.f32 %v1318, %v531
        %v1388 = vmul.f32 %v1321, %v531
        %v1389 = vmul.f32 %v1323, %v531
        %v1390 = vmul.f32 %v1326, %v531
        %v1391 = vmul.f32 %v1328, %v531
        %v1392 = vmul.f32 %v1331, %v531
        %v1393 = vmul.f32 %v1333, %v531
        %v1394 = vmul.f32 %v1336, %v531
        %v1395 = vmul.f32 %v1338, %v531
        %v1396 = vmul.f32 %v1341, %v531
        %v1397 = vmul.f32 %v1343, %v531
        %v1398 = vmul.f32 %v1346, %v531
        %v1399 = vmul.f32 %v1348, %v531
        %v1400 = vmul.f32 %v1351, %v531
        %v1401 = vmul.f32 %v1353, %v531
        %v1402 = vmul.f32 %v1356, %v531
        %v1403 = vmul.f32 %v1358, %v531
        %v1404 = vmul.f32 %v1361, %v531
        %v1405 = vmul.f32 %v1363, %v531
        %v1406 = vmul.f32 %v1366, %v531
        %v1407 = vmul.f32 %v1368, %v531
        %v1408 = vmul.f32 %v1371, %v531
        %v1409 = vmul.f32 %v1373, %v531
        %v1410 = vmul.f32 %v1376, %v531
        %v1411 = vmul.f32 %v1378, %v531
        %v1412 = vadd.f32 %v1380, %v566
        %v1413 = vadd.f32 %v1381, %v566
        %v1414 = vadd.f32 %v1382, %v566
        %v1415 = vadd.f32 %v1383, %v566
        %v1416 = vadd.f32 %v1384, %v566
        %v1417 = vadd.f32 %v1385, %v566
        %v1418 = vadd.f32 %v1386, %v566
        %v1419 = vadd.f32 %v1387, %v566
        %v1420 = vadd.f32 %v1388, %v566
        %v1421 = vadd.f32 %v1389, %v566
        %v1422 = vadd.f32 %v1390, %v566
        %v1423 = vadd.f32 %v1391, %v566
        %v1424 = vadd.f32 %v1392, %v566
        %v1425 = vadd.f32 %v1393, %v566
        %v1426 = vadd.f32 %v1394, %v566
        %v1427 = vadd.f32 %v1395, %v566
        %v1428 = vadd.f32 %v1396, %v566
        %v1429 = vadd.f32 %v1397, %v566
        %v1430 = vadd.f32 %v1398, %v566
        %v1431 = vadd.f32 %v1399, %v566
        %v1432 = vadd.f32 %v1400, %v566
        %v1433 = vadd.f32 %v1401, %v566
        %v1434 = vadd.f32 %v1402, %v566
        %v1435 = vadd.f32 %v1403, %v566
        %v1436 = vadd.f32 %v1404, %v566
        %v1437 = vadd.f32 %v1405, %v566
        %v1438 = vadd.f32 %v1406, %v566
        %v1439 = vadd.f32 %v1407, %v566
        %v1440 = vadd.f32 %v1408, %v566
        %v1441 = vadd.f32 %v1409, %v566
        %v1442 = vadd.f32 %v1410, %v566
        %v1443 = vadd.f32 %v1411, %v566
        %v1444 = vmax.f32 %v1412, 0.0
        %v1445 = vmax.f32 %v1413, 0.0
        %v1446 = vmax.f32 %v1414, 0.0
        %v1447 = vmax.f32 %v1415, 0.0
        %v1448 = vmax.f32 %v1416, 0.0
        %v1449 = vmax.f32 %v1417, 0.0
        %v1450 = vmax.f32 %v1418, 0.0
        %v1451 = vmax.f32 %v1419, 0.0
        %v1452 = vmax.f32 %v1420, 0.0
        %v1453 = vmax.f32 %v1421, 0.0
        %v1454 = vmax.f32 %v1422, 0.0
        %v1455 = vmax.f32 %v1423, 0.0
        %v1456 = vmax.f32 %v1424, 0.0
        %v1457 = vmax.f32 %v1425, 0.0
        %v1458 = vmax.f32 %v1426, 0.0
        %v1459 = vmax.f32 %v1427, 0.0
        %v1460 = vmax.f32 %v1428, 0.0
        %v1461 = vmax.f32 %v1429, 0.0
        %v1462 = vmax.f32 %v1430, 0.0
        %v1463 = vmax.f32 %v1431, 0.0
        %v1464 = vmax.f32 %v1432, 0.0
        %v1465 = vmax.f32 %v1433, 0.0
        %v1466 = vmax.f32 %v1434, 0.0
        %v1467 = vmax.f32 %v1435, 0.0
        %v1468 = vmax.f32 %v1436, 0.0
        %v1469 = vmax.f32 %v1437, 0.0
        %v1470 = vmax.f32 %v1438, 0.0
        %v1471 = vmax.f32 %v1439, 0.0
        %v1472 = vmax.f32 %v1440, 0.0
        %v1473 = vmax.f32 %v1441, 0.0
        %v1474 = vmax.f32 %v1442, 0.0
        %v1475 = vmax.f32 %v1443, 0.0
        %v1476 = vpack.c.bf16 %v1444, %v1444
        %v1477 = vpack.c.bf16 %v1445, %v1445
        %v1478 = vpack.c.bf16 %v1446, %v1446
        %v1479 = vpack.c.bf16 %v1447, %v1447
        %v1480 = vpack.c.bf16 %v1448, %v1448
        %v1481 = vpack.c.bf16 %v1449, %v1449
        %v1482 = vpack.c.bf16 %v1450, %v1450
        %v1483 = vpack.c.bf16 %v1451, %v1451
        %v1484 = vpack.c.bf16 %v1452, %v1452
        %v1485 = vpack.c.bf16 %v1453, %v1453
        %v1486 = vpack.c.bf16 %v1454, %v1454
        %v1487 = vpack.c.bf16 %v1455, %v1455
        %v1488 = vpack.c.bf16 %v1456, %v1456
        %v1489 = vpack.c.bf16 %v1457, %v1457
        %v1490 = vpack.c.bf16 %v1458, %v1458
        %v1491 = vpack.c.bf16 %v1459, %v1459
        %v1492 = vpack.c.bf16 %v1460, %v1460
        %v1493 = vpack.c.bf16 %v1461, %v1461
        %v1494 = vpack.c.bf16 %v1462, %v1462
        %v1495 = vpack.c.bf16 %v1463, %v1463
        %v1496 = vpack.c.bf16 %v1464, %v1464
        %v1497 = vpack.c.bf16 %v1465, %v1465
        %v1498 = vpack.c.bf16 %v1466, %v1466
        %v1499 = vpack.c.bf16 %v1467, %v1467
        %v1500 = vpack.c.bf16 %v1468, %v1468
        %v1501 = vpack.c.bf16 %v1469, %v1469
        %v1502 = vpack.c.bf16 %v1470, %v1470
        %v1503 = vpack.c.bf16 %v1471, %v1471
        %v1504 = vpack.c.bf16 %v1472, %v1472
        %v1505 = vpack.c.bf16 %v1473, %v1473
        %v1506 = vpack.c.bf16 %v1474, %v1474
        %v1507 = vpack.c.bf16 %v1475, %v1475
        %s1508 = scalar_lea.vmem %s248, 256 [#allocation2]
        %1509 = vst.msk [vmem:[%s1508] sm:$0xf] %vm664, %v1476
        %1510 = vst.msk [vmem:[%s1508 + $0x4] sm:$0xf] %vm664, %v1477
        %1511 = vst.msk [vmem:[%s1508 + $0x8] sm:$0xf] %vm664, %v1478
        %1512 = vst.msk [vmem:[%s1508 + $0xc] sm:$0xf] %vm664, %v1479
        %1513 = vst.msk [vmem:[%s1508 + $0x10] sm:$0xf] %vm664, %v1480
        %1514 = vst.msk [vmem:[%s1508 + $0x14] sm:$0xf] %vm664, %v1481
        %1515 = vst.msk [vmem:[%s1508 + $0x18] sm:$0xf] %vm664, %v1482
        %1516 = vst.msk [vmem:[%s1508 + $0x1c] sm:$0xf] %vm664, %v1483
        %1517 = vst.msk [vmem:[%s1508 + $0x20] sm:$0xf] %vm664, %v1484
        %1518 = vst.msk [vmem:[%s1508 + $0x24] sm:$0xf] %vm664, %v1485
        %1519 = vst.msk [vmem:[%s1508 + $0x28] sm:$0xf] %vm664, %v1486
        %1520 = vst.msk [vmem:[%s1508 + $0x2c] sm:$0xf] %vm664, %v1487
        %1521 = vst.msk [vmem:[%s1508 + $0x30] sm:$0xf] %vm664, %v1488
        %1522 = vst.msk [vmem:[%s1508 + $0x34] sm:$0xf] %vm664, %v1489
        %1523 = vst.msk [vmem:[%s1508 + $0x38] sm:$0xf] %vm664, %v1490
        %1524 = vst.msk [vmem:[%s1508 + $0x3c] sm:$0xf] %vm664, %v1491
        %1525 = vst.msk [vmem:[%s1508 + $0x40] sm:$0xf] %vm664, %v1492
        %1526 = vst.msk [vmem:[%s1508 + $0x44] sm:$0xf] %vm664, %v1493
        %1527 = vst.msk [vmem:[%s1508 + $0x48] sm:$0xf] %vm664, %v1494
        %1528 = vst.msk [vmem:[%s1508 + $0x4c] sm:$0xf] %vm664, %v1495
        %1529 = vst.msk [vmem:[%s1508 + $0x50] sm:$0xf] %vm664, %v1496
        %1530 = vst.msk [vmem:[%s1508 + $0x54] sm:$0xf] %vm664, %v1497
        %1531 = vst.msk [vmem:[%s1508 + $0x58] sm:$0xf] %vm664, %v1498
        %1532 = vst.msk [vmem:[%s1508 + $0x5c] sm:$0xf] %vm664, %v1499
        %1533 = vst.msk [vmem:[%s1508 + $0x60] sm:$0xf] %vm664, %v1500
        %1534 = vst.msk [vmem:[%s1508 + $0x64] sm:$0xf] %vm664, %v1501
        %1535 = vst.msk [vmem:[%s1508 + $0x68] sm:$0xf] %vm664, %v1502
        %1536 = vst.msk [vmem:[%s1508 + $0x6c] sm:$0xf] %vm664, %v1503
        %1537 = vst.msk [vmem:[%s1508 + $0x70] sm:$0xf] %vm664, %v1504
        %1538 = vst.msk [vmem:[%s1508 + $0x74] sm:$0xf] %vm664, %v1505
        %1539 = vst.msk [vmem:[%s1508 + $0x78] sm:$0xf] %vm664, %v1506
        %1540 = vst.msk [vmem:[%s1508 + $0x7c] sm:$0xf] %vm664, %v1507
        %s1541 = sadd.s32 %s266, 12
        %s1542 = smul.u32 %s1541, 8
        %s1543 = smul.addr %s1542, 4
        %s1544 = scalar_lea.vmem %s253, %s1543
        %v1545 = vld [vmem:[%s1544] sm:$0xf]
        %v1546 = vld [vmem:[%s1544 + $0x4] sm:$0xf]
        %v1547 = vld [vmem:[%s1544 + $0x8] sm:$0xf]
        %v1548 = vld [vmem:[%s1544 + $0xc] sm:$0xf]
        %v1549 = vld [vmem:[%s1544 + $0x10] sm:$0xf]
        %v1550 = vld [vmem:[%s1544 + $0x14] sm:$0xf]
        %v1551 = vld [vmem:[%s1544 + $0x18] sm:$0xf]
        %v1552 = vld [vmem:[%s1544 + $0x1c] sm:$0xf]
        %v1553 = vld [vmem:[%s1544 + $0x20] sm:$0xf]
        %v1554 = vld [vmem:[%s1544 + $0x24] sm:$0xf]
        %v1555 = vld [vmem:[%s1544 + $0x28] sm:$0xf]
        %v1556 = vld [vmem:[%s1544 + $0x2c] sm:$0xf]
        %v1557 = vld [vmem:[%s1544 + $0x30] sm:$0xf]
        %v1558 = vld [vmem:[%s1544 + $0x34] sm:$0xf]
        %v1559 = vld [vmem:[%s1544 + $0x38] sm:$0xf]
        %v1560 = vld [vmem:[%s1544 + $0x3c] sm:$0xf]
        %v1561 = vld [vmem:[%s1544 + $0x40] sm:$0xf]
        %v1562 = vld [vmem:[%s1544 + $0x44] sm:$0xf]
        %v1563 = vld [vmem:[%s1544 + $0x48] sm:$0xf]
        %v1564 = vld [vmem:[%s1544 + $0x4c] sm:$0xf]
        %v1565 = vld [vmem:[%s1544 + $0x50] sm:$0xf]
        %v1566 = vld [vmem:[%s1544 + $0x54] sm:$0xf]
        %v1567 = vld [vmem:[%s1544 + $0x58] sm:$0xf]
        %v1568 = vld [vmem:[%s1544 + $0x5c] sm:$0xf]
        %v1569 = vld [vmem:[%s1544 + $0x60] sm:$0xf]
        %v1570 = vld [vmem:[%s1544 + $0x64] sm:$0xf]
        %v1571 = vld [vmem:[%s1544 + $0x68] sm:$0xf]
        %v1572 = vld [vmem:[%s1544 + $0x6c] sm:$0xf]
        %v1573 = vld [vmem:[%s1544 + $0x70] sm:$0xf]
        %v1574 = vld [vmem:[%s1544 + $0x74] sm:$0xf]
        %v1575 = vld [vmem:[%s1544 + $0x78] sm:$0xf]
        %v1576 = vld [vmem:[%s1544 + $0x7c] sm:$0xf]
        %v1577 = vld [vmem:[%s257] sm:$0xf]
        %v1578 = vld [vmem:[%s257 + $0x4] sm:$0xf]
        %v1611 = vunpack.c.l.b16 %v1545
        %v1612 = vunpack.c.l.b16 %v1546
        %v1613 = vunpack.c.l.b16 %v1547
        %v1614 = vunpack.c.l.b16 %v1548
        %v1615 = vunpack.c.l.b16 %v1549
        %v1616 = vunpack.c.l.b16 %v1550
        %v1617 = vunpack.c.l.b16 %v1551
        %v1618 = vunpack.c.l.b16 %v1552
        %v1619 = vunpack.c.l.b16 %v1553
        %v1620 = vunpack.c.l.b16 %v1554
        %v1621 = vunpack.c.l.b16 %v1555
        %v1622 = vunpack.c.l.b16 %v1556
        %v1623 = vunpack.c.l.b16 %v1557
        %v1624 = vunpack.c.l.b16 %v1558
        %v1625 = vunpack.c.l.b16 %v1559
        %v1626 = vunpack.c.l.b16 %v1560
        %v1627 = vunpack.c.l.b16 %v1561
        %v1628 = vunpack.c.l.b16 %v1562
        %v1629 = vunpack.c.l.b16 %v1563
        %v1630 = vunpack.c.l.b16 %v1564
        %v1631 = vunpack.c.l.b16 %v1565
        %v1632 = vunpack.c.l.b16 %v1566
        %v1633 = vunpack.c.l.b16 %v1567
        %v1634 = vunpack.c.l.b16 %v1568
        %v1635 = vunpack.c.l.b16 %v1569
        %v1636 = vunpack.c.l.b16 %v1570
        %v1637 = vunpack.c.l.b16 %v1571
        %v1638 = vunpack.c.l.b16 %v1572
        %v1639 = vunpack.c.l.b16 %v1573
        %v1640 = vunpack.c.l.b16 %v1574
        %v1641 = vunpack.c.l.b16 %v1575
        %v1642 = vunpack.c.l.b16 %v1576
        %v1643 = vpack.c.b16 %v1612, %v1611
        %v1644 = vpack.c.b16 %v1614, %v1613
        %v1645 = vpack.c.b16 %v1616, %v1615
        %v1646 = vpack.c.b16 %v1618, %v1617
        %v1647 = vpack.c.b16 %v1620, %v1619
        %v1648 = vpack.c.b16 %v1622, %v1621
        %v1649 = vpack.c.b16 %v1624, %v1623
        %v1650 = vpack.c.b16 %v1626, %v1625
        %v1651 = vpack.c.b16 %v1628, %v1627
        %v1652 = vpack.c.b16 %v1630, %v1629
        %v1653 = vpack.c.b16 %v1632, %v1631
        %v1654 = vpack.c.b16 %v1634, %v1633
        %v1655 = vpack.c.b16 %v1636, %v1635
        %v1656 = vpack.c.b16 %v1638, %v1637
        %v1657 = vpack.c.b16 %v1640, %v1639
        %v1658 = vpack.c.b16 %v1642, %v1641
        %v1661 = vunpack.c.l.b16 %v1577
        %v1662 = vunpack.c.l.b16 %v1578
        %v1663 = vpack.c.b16 %v1662, %v1661
        %v1666 = vsel %vm392, %v1643, 0
        %v1669 = vsel %vm392, %v1644, 0
        %v1672 = vsel %vm392, %v1645, 0
        %v1675 = vsel %vm392, %v1646, 0
        %v1678 = vsel %vm392, %v1647, 0
        %v1681 = vsel %vm392, %v1648, 0
        %v1684 = vsel %vm392, %v1649, 0
        %v1687 = vsel %vm392, %v1650, 0
        %v1690 = vsel %vm392, %v1651, 0
        %v1693 = vsel %vm392, %v1652, 0
        %v1696 = vsel %vm392, %v1653, 0
        %v1699 = vsel %vm392, %v1654, 0
        %v1702 = vsel %vm392, %v1655, 0
        %v1705 = vsel %vm392, %v1656, 0
        %v1708 = vsel %vm392, %v1657, 0
        %v1711 = vsel %vm392, %v1658, 0
        %1713 = vmatpush.bf16.msra.mxu0 0
        %1714 = vmatpush.bf16.msra.mxu0 0
        %1715 = vmatpush.bf16.msra.mxu0 0
        %1716 = vmatpush.bf16.msra.mxu0 0
        %1717 = vmatpush.bf16.msra.mxu0 0
        %1718 = vmatpush.bf16.msra.mxu0 0
        %1719 = vmatpush.bf16.msra.mxu0 0
        %1720 = vmatpush.bf16.msra.mxu0 %v1663
        %1721 = vmatmul.bf16.gmra.mxu0 %v1666
        %v1722 = vpop.f32.mrf.mxu0
        %v1723 = vadd.f32 0.0, %v1722
        %v1724 = vpop.f32.mrf.mxu0
        %v1725 = vadd.f32 0.0, %v1724
        %1726 = vmatmul.bf16.gmra.mxu0 %v1669
        %v1727 = vpop.f32.mrf.mxu0
        %v1728 = vadd.f32 0.0, %v1727
        %v1729 = vpop.f32.mrf.mxu0
        %v1730 = vadd.f32 0.0, %v1729
        %1731 = vmatmul.bf16.gmra.mxu0 %v1672
        %v1732 = vpop.f32.mrf.mxu0
        %v1733 = vadd.f32 0.0, %v1732
        %v1734 = vpop.f32.mrf.mxu0
        %v1735 = vadd.f32 0.0, %v1734
        %1736 = vmatmul.bf16.gmra.mxu0 %v1675
        %v1737 = vpop.f32.mrf.mxu0
        %v1738 = vadd.f32 0.0, %v1737
        %v1739 = vpop.f32.mrf.mxu0
        %v1740 = vadd.f32 0.0, %v1739
        %1741 = vmatmul.bf16.gmra.mxu0 %v1678
        %v1742 = vpop.f32.mrf.mxu0
        %v1743 = vadd.f32 0.0, %v1742
        %v1744 = vpop.f32.mrf.mxu0
        %v1745 = vadd.f32 0.0, %v1744
        %1746 = vmatmul.bf16.gmra.mxu0 %v1681
        %v1747 = vpop.f32.mrf.mxu0
        %v1748 = vadd.f32 0.0, %v1747
        %v1749 = vpop.f32.mrf.mxu0
        %v1750 = vadd.f32 0.0, %v1749
        %1751 = vmatmul.bf16.gmra.mxu0 %v1684
        %v1752 = vpop.f32.mrf.mxu0
        %v1753 = vadd.f32 0.0, %v1752
        %v1754 = vpop.f32.mrf.mxu0
        %v1755 = vadd.f32 0.0, %v1754
        %1756 = vmatmul.bf16.gmra.mxu0 %v1687
        %v1757 = vpop.f32.mrf.mxu0
        %v1758 = vadd.f32 0.0, %v1757
        %v1759 = vpop.f32.mrf.mxu0
        %v1760 = vadd.f32 0.0, %v1759
        %1761 = vmatmul.bf16.gmra.mxu0 %v1690
        %v1762 = vpop.f32.mrf.mxu0
        %v1763 = vadd.f32 0.0, %v1762
        %v1764 = vpop.f32.mrf.mxu0
        %v1765 = vadd.f32 0.0, %v1764
        %1766 = vmatmul.bf16.gmra.mxu0 %v1693
        %v1767 = vpop.f32.mrf.mxu0
        %v1768 = vadd.f32 0.0, %v1767
        %v1769 = vpop.f32.mrf.mxu0
        %v1770 = vadd.f32 0.0, %v1769
        %1771 = vmatmul.bf16.gmra.mxu0 %v1696
        %v1772 = vpop.f32.mrf.mxu0
        %v1773 = vadd.f32 0.0, %v1772
        %v1774 = vpop.f32.mrf.mxu0
        %v1775 = vadd.f32 0.0, %v1774
        %1776 = vmatmul.bf16.gmra.mxu0 %v1699
        %v1777 = vpop.f32.mrf.mxu0
        %v1778 = vadd.f32 0.0, %v1777
        %v1779 = vpop.f32.mrf.mxu0
        %v1780 = vadd.f32 0.0, %v1779
        %1781 = vmatmul.bf16.gmra.mxu0 %v1702
        %v1782 = vpop.f32.mrf.mxu0
        %v1783 = vadd.f32 0.0, %v1782
        %v1784 = vpop.f32.mrf.mxu0
        %v1785 = vadd.f32 0.0, %v1784
        %1786 = vmatmul.bf16.gmra.mxu0 %v1705
        %v1787 = vpop.f32.mrf.mxu0
        %v1788 = vadd.f32 0.0, %v1787
        %v1789 = vpop.f32.mrf.mxu0
        %v1790 = vadd.f32 0.0, %v1789
        %1791 = vmatmul.bf16.gmra.mxu0 %v1708
        %v1792 = vpop.f32.mrf.mxu0
        %v1793 = vadd.f32 0.0, %v1792
        %v1794 = vpop.f32.mrf.mxu0
        %v1795 = vadd.f32 0.0, %v1794
        %1796 = vmatmul.bf16.gmra.mxu0 %v1711
        %v1797 = vpop.f32.mrf.mxu0
        %v1798 = vadd.f32 0.0, %v1797
        %v1799 = vpop.f32.mrf.mxu0
        %v1800 = vadd.f32 0.0, %v1799
        %1801 = vdwg.mxu0
        %v1802 = vmul.f32 %v1723, %v531
        %v1803 = vmul.f32 %v1725, %v531
        %v1804 = vmul.f32 %v1728, %v531
        %v1805 = vmul.f32 %v1730, %v531
        %v1806 = vmul.f32 %v1733, %v531
        %v1807 = vmul.f32 %v1735, %v531
        %v1808 = vmul.f32 %v1738, %v531
        %v1809 = vmul.f32 %v1740, %v531
        %v1810 = vmul.f32 %v1743, %v531
        %v1811 = vmul.f32 %v1745, %v531
        %v1812 = vmul.f32 %v1748, %v531
        %v1813 = vmul.f32 %v1750, %v531
        %v1814 = vmul.f32 %v1753, %v531
        %v1815 = vmul.f32 %v1755, %v531
        %v1816 = vmul.f32 %v1758, %v531
        %v1817 = vmul.f32 %v1760, %v531
        %v1818 = vmul.f32 %v1763, %v531
        %v1819 = vmul.f32 %v1765, %v531
        %v1820 = vmul.f32 %v1768, %v531
        %v1821 = vmul.f32 %v1770, %v531
        %v1822 = vmul.f32 %v1773, %v531
        %v1823 = vmul.f32 %v1775, %v531
        %v1824 = vmul.f32 %v1778, %v531
        %v1825 = vmul.f32 %v1780, %v531
        %v1826 = vmul.f32 %v1783, %v531
        %v1827 = vmul.f32 %v1785, %v531
        %v1828 = vmul.f32 %v1788, %v531
        %v1829 = vmul.f32 %v1790, %v531
        %v1830 = vmul.f32 %v1793, %v531
        %v1831 = vmul.f32 %v1795, %v531
        %v1832 = vmul.f32 %v1798, %v531
        %v1833 = vmul.f32 %v1800, %v531
        %v1834 = vadd.f32 %v1802, %v566
        %v1835 = vadd.f32 %v1803, %v566
        %v1836 = vadd.f32 %v1804, %v566
        %v1837 = vadd.f32 %v1805, %v566
        %v1838 = vadd.f32 %v1806, %v566
        %v1839 = vadd.f32 %v1807, %v566
        %v1840 = vadd.f32 %v1808, %v566
        %v1841 = vadd.f32 %v1809, %v566
        %v1842 = vadd.f32 %v1810, %v566
        %v1843 = vadd.f32 %v1811, %v566
        %v1844 = vadd.f32 %v1812, %v566
        %v1845 = vadd.f32 %v1813, %v566
        %v1846 = vadd.f32 %v1814, %v566
        %v1847 = vadd.f32 %v1815, %v566
        %v1848 = vadd.f32 %v1816, %v566
        %v1849 = vadd.f32 %v1817, %v566
        %v1850 = vadd.f32 %v1818, %v566
        %v1851 = vadd.f32 %v1819, %v566
        %v1852 = vadd.f32 %v1820, %v566
        %v1853 = vadd.f32 %v1821, %v566
        %v1854 = vadd.f32 %v1822, %v566
        %v1855 = vadd.f32 %v1823, %v566
        %v1856 = vadd.f32 %v1824, %v566
        %v1857 = vadd.f32 %v1825, %v566
        %v1858 = vadd.f32 %v1826, %v566
        %v1859 = vadd.f32 %v1827, %v566
        %v1860 = vadd.f32 %v1828, %v566
        %v1861 = vadd.f32 %v1829, %v566
        %v1862 = vadd.f32 %v1830, %v566
        %v1863 = vadd.f32 %v1831, %v566
        %v1864 = vadd.f32 %v1832, %v566
        %v1865 = vadd.f32 %v1833, %v566
        %v1866 = vmax.f32 %v1834, 0.0
        %v1867 = vmax.f32 %v1835, 0.0
        %v1868 = vmax.f32 %v1836, 0.0
        %v1869 = vmax.f32 %v1837, 0.0
        %v1870 = vmax.f32 %v1838, 0.0
        %v1871 = vmax.f32 %v1839, 0.0
        %v1872 = vmax.f32 %v1840, 0.0
        %v1873 = vmax.f32 %v1841, 0.0
        %v1874 = vmax.f32 %v1842, 0.0
        %v1875 = vmax.f32 %v1843, 0.0
        %v1876 = vmax.f32 %v1844, 0.0
        %v1877 = vmax.f32 %v1845, 0.0
        %v1878 = vmax.f32 %v1846, 0.0
        %v1879 = vmax.f32 %v1847, 0.0
        %v1880 = vmax.f32 %v1848, 0.0
        %v1881 = vmax.f32 %v1849, 0.0
        %v1882 = vmax.f32 %v1850, 0.0
        %v1883 = vmax.f32 %v1851, 0.0
        %v1884 = vmax.f32 %v1852, 0.0
        %v1885 = vmax.f32 %v1853, 0.0
        %v1886 = vmax.f32 %v1854, 0.0
        %v1887 = vmax.f32 %v1855, 0.0
        %v1888 = vmax.f32 %v1856, 0.0
        %v1889 = vmax.f32 %v1857, 0.0
        %v1890 = vmax.f32 %v1858, 0.0
        %v1891 = vmax.f32 %v1859, 0.0
        %v1892 = vmax.f32 %v1860, 0.0
        %v1893 = vmax.f32 %v1861, 0.0
        %v1894 = vmax.f32 %v1862, 0.0
        %v1895 = vmax.f32 %v1863, 0.0
        %v1896 = vmax.f32 %v1864, 0.0
        %v1897 = vmax.f32 %v1865, 0.0
        %v1898 = vpack.c.bf16 %v1866, %v1866
        %v1899 = vpack.c.bf16 %v1867, %v1867
        %v1900 = vpack.c.bf16 %v1868, %v1868
        %v1901 = vpack.c.bf16 %v1869, %v1869
        %v1902 = vpack.c.bf16 %v1870, %v1870
        %v1903 = vpack.c.bf16 %v1871, %v1871
        %v1904 = vpack.c.bf16 %v1872, %v1872
        %v1905 = vpack.c.bf16 %v1873, %v1873
        %v1906 = vpack.c.bf16 %v1874, %v1874
        %v1907 = vpack.c.bf16 %v1875, %v1875
        %v1908 = vpack.c.bf16 %v1876, %v1876
        %v1909 = vpack.c.bf16 %v1877, %v1877
        %v1910 = vpack.c.bf16 %v1878, %v1878
        %v1911 = vpack.c.bf16 %v1879, %v1879
        %v1912 = vpack.c.bf16 %v1880, %v1880
        %v1913 = vpack.c.bf16 %v1881, %v1881
        %v1914 = vpack.c.bf16 %v1882, %v1882
        %v1915 = vpack.c.bf16 %v1883, %v1883
        %v1916 = vpack.c.bf16 %v1884, %v1884
        %v1917 = vpack.c.bf16 %v1885, %v1885
        %v1918 = vpack.c.bf16 %v1886, %v1886
        %v1919 = vpack.c.bf16 %v1887, %v1887
        %v1920 = vpack.c.bf16 %v1888, %v1888
        %v1921 = vpack.c.bf16 %v1889, %v1889
        %v1922 = vpack.c.bf16 %v1890, %v1890
        %v1923 = vpack.c.bf16 %v1891, %v1891
        %v1924 = vpack.c.bf16 %v1892, %v1892
        %v1925 = vpack.c.bf16 %v1893, %v1893
        %v1926 = vpack.c.bf16 %v1894, %v1894
        %v1927 = vpack.c.bf16 %v1895, %v1895
        %v1928 = vpack.c.bf16 %v1896, %v1896
        %v1929 = vpack.c.bf16 %v1897, %v1897
        %s1930 = scalar_lea.vmem %s248, 384 [#allocation2]
        %1931 = vst.msk [vmem:[%s1930] sm:$0xf] %vm664, %v1898
        %1932 = vst.msk [vmem:[%s1930 + $0x4] sm:$0xf] %vm664, %v1899
        %1933 = vst.msk [vmem:[%s1930 + $0x8] sm:$0xf] %vm664, %v1900
        %1934 = vst.msk [vmem:[%s1930 + $0xc] sm:$0xf] %vm664, %v1901
        %1935 = vst.msk [vmem:[%s1930 + $0x10] sm:$0xf] %vm664, %v1902
        %1936 = vst.msk [vmem:[%s1930 + $0x14] sm:$0xf] %vm664, %v1903
        %1937 = vst.msk [vmem:[%s1930 + $0x18] sm:$0xf] %vm664, %v1904
        %1938 = vst.msk [vmem:[%s1930 + $0x1c] sm:$0xf] %vm664, %v1905
        %1939 = vst.msk [vmem:[%s1930 + $0x20] sm:$0xf] %vm664, %v1906
        %1940 = vst.msk [vmem:[%s1930 + $0x24] sm:$0xf] %vm664, %v1907
        %1941 = vst.msk [vmem:[%s1930 + $0x28] sm:$0xf] %vm664, %v1908
        %1942 = vst.msk [vmem:[%s1930 + $0x2c] sm:$0xf] %vm664, %v1909
        %1943 = vst.msk [vmem:[%s1930 + $0x30] sm:$0xf] %vm664, %v1910
        %1944 = vst.msk [vmem:[%s1930 + $0x34] sm:$0xf] %vm664, %v1911
        %1945 = vst.msk [vmem:[%s1930 + $0x38] sm:$0xf] %vm664, %v1912
        %1946 = vst.msk [vmem:[%s1930 + $0x3c] sm:$0xf] %vm664, %v1913
        %1947 = vst.msk [vmem:[%s1930 + $0x40] sm:$0xf] %vm664, %v1914
        %1948 = vst.msk [vmem:[%s1930 + $0x44] sm:$0xf] %vm664, %v1915
        %1949 = vst.msk [vmem:[%s1930 + $0x48] sm:$0xf] %vm664, %v1916
        %1950 = vst.msk [vmem:[%s1930 + $0x4c] sm:$0xf] %vm664, %v1917
        %1951 = vst.msk [vmem:[%s1930 + $0x50] sm:$0xf] %vm664, %v1918
        %1952 = vst.msk [vmem:[%s1930 + $0x54] sm:$0xf] %vm664, %v1919
        %1953 = vst.msk [vmem:[%s1930 + $0x58] sm:$0xf] %vm664, %v1920
        %1954 = vst.msk [vmem:[%s1930 + $0x5c] sm:$0xf] %vm664, %v1921
        %1955 = vst.msk [vmem:[%s1930 + $0x60] sm:$0xf] %vm664, %v1922
        %1956 = vst.msk [vmem:[%s1930 + $0x64] sm:$0xf] %vm664, %v1923
        %1957 = vst.msk [vmem:[%s1930 + $0x68] sm:$0xf] %vm664, %v1924
        %1958 = vst.msk [vmem:[%s1930 + $0x6c] sm:$0xf] %vm664, %v1925
        %1959 = vst.msk [vmem:[%s1930 + $0x70] sm:$0xf] %vm664, %v1926
        %1960 = vst.msk [vmem:[%s1930 + $0x74] sm:$0xf] %vm664, %v1927
        %1961 = vst.msk [vmem:[%s1930 + $0x78] sm:$0xf] %vm664, %v1928
        %1962 = vst.msk [vmem:[%s1930 + $0x7c] sm:$0xf] %vm664, %v1929
        %s1963 = sand.u32 %s153, 1
        %s1964 = scalar_lea.sflag [#allocation3], %s1963
        %s1965 = sand.u32 %s153, 1
        %s1966 = smul.addr %s1965, 512
        %s1967 = scalar_lea.vmem [#allocation2], %s1966
        // Predicated region
        $region37: #{tpu_custom_call.1} parent=35 // pred_check
          %p1968 = pneg %p163
        $region38: #{tpu_custom_call.1} parent=35 // pred_check_branch
          %1970 = sbr.rel (%p1968) target = $region40
        $region39: #{tpu_custom_call.1} parent=35 // pred_region
          %s1971 = smul.u32 16, %s25
          %1973 = vsyncadd %s1964, 0
          %s1974 = smul.addr %s1971, 8
          %s1975 = sadd.s32 %s23, %s1974
          %s1976 = smul.addr %s24, 512
          %s1977 = sadd.s32 %s1975, %s1976
          %s1978 = smul.addr %s1977, 4
          %s1979 = scalar_lea.hbm %s4, %s1978
          %s1980 = sshll.u32 %s1967, 4
          %s1981 = int_to_ptr.vmem [resolvable:$true] %s1980
          %s1982 = sshll.u32 %s1979, 4
          %s1983 = int_to_ptr.hbm [resolvable:$true] %s1982
          %1988 = dma.vmem_to_hbm [thread:$0]  %s1981, 8192, %s1983, %s1964, 64, 64, 4
        $region40: #{tpu_custom_call.1} parent=35 // pred_fallthru
          _
      $region36: #{tpu_custom_call.1} parent=5 // pred_fallthru
        _
      %p1989 = scmp.le.s32.totalorder 2, %s13
      // Predicated region
      $region41: #{tpu_custom_call.1} parent=5 // pred_check
        %p1990 = pneg %p1989
      $region42: #{tpu_custom_call.1} parent=5 // pred_check_branch
        %1992 = sbr.rel (%p1990) target = $region44
      $region43: #{tpu_custom_call.1} parent=5 // pred_region
        %s1993 = ssub.s32 %s13, 2
        // Predicated region
        $region45: #{tpu_custom_call.1} parent=43 // pred_check
          %p1994 = pneg %p169
        $region46: #{tpu_custom_call.1} parent=43 // pred_check_branch
          %1996 = sbr.rel (%p1994) target = $region48
        $region47: #{tpu_custom_call.1} parent=43 // pred_region
          %s1997 = sand.u32 %s154, 1
          %s1998 = scalar_lea.sflag [#allocation3], %s1997
          %s1999 = sand.u32 %s154, 1
          %s2000 = smul.addr %s1999, 512
          %s2001 = scalar_lea.vmem [#allocation2], %s2000
          %2003 = dma.done %s1998, 8192
        $region48: #{tpu_custom_call.1} parent=43 // pred_fallthru
          _
      $region44: #{tpu_custom_call.1} parent=5 // pred_fallthru
        _
    $region6: #{tpu_custom_call.1} parent=1 // loop_footer
      %s17 = sadd.s32 1, %s13
    $region7: #{tpu_custom_call.1} parent=1 // loop_footer_branch
      %12 = sbr.rel target = $region3
    $region8: #{tpu_custom_call.1} parent=1 // loop_exit
      _
    %2004 = vsyncpa [#allocation3], 1
    %s2005 = scalar_lea.sflag [#allocation3], 1
    %2006 = vsyncpa %s2005, 1

</llo_original>
